<compile_context>
chip_gen: v6e
topology: v6e:2x2x1
jax: 0.10.0
libtpu: 0.0.40
codegen_flags: <defaults>
</compile_context>

<pallas_src>
import functools

import jax
import jax.numpy as jnp
from jax.experimental import pallas as pl
from jax.experimental.pallas import tpu as pltpu

IN_FEATURES = 50 * 7 * 7   # 2450
HIDDEN = 100
NUM_CLASSES = 2
BN_EPS = 1e-5
H_PAD = 128                # 100 -> one full lane / MXU column block


def _round_up(x, m):
    return ((x + m - 1) // m) * m


# ---------------------------------------------------------------------------
# Phase 1: h = x @ W1 (bf16 operands, f32 MXU accumulate), streamed over batch
# tiles.  Per-tile, the f32 result is downcast to bf16 and written straight to
# HBM, and per-feature sum / sum-of-squares are accumulated into a resident
# (2, H_PAD) f32 output (BatchNorm statistics over the whole batch).
# ---------------------------------------------------------------------------
def _matmul_stats_kernel(x_ref, w1_ref, h_ref, stats_ref):
    i = pl.program_id(0)

    h = jnp.dot(x_ref[...], w1_ref[...], preferred_element_type=jnp.float32)

    @pl.when(i == 0)
    def _():
        stats_ref[...] = jnp.zeros_like(stats_ref)

    # Zero-padded batch rows give h == 0 (no bias is added), so they add
    # nothing to either statistic -- no masking required.
    stats_ref[0:1, :] += jnp.sum(h, axis=0, keepdims=True)
    stats_ref[1:2, :] += jnp.sum(h * h, axis=0, keepdims=True)

    h_ref[...] = h.astype(h_ref.dtype)


# ---------------------------------------------------------------------------
# Phase 2: BN (precomputed scale/shift) + ReLU + 2-class head + softmax,
# streamed over batch tiles of h.
#   pk_ref rows: 0 = scale  (gamma * rstd)
#                1 = shift  (beta - mean * scale)
#                2 = w2[:, 0] - w2[:, 1]  (zero padded past HIDDEN)
#                3 = [b2[0] - b2[1], 0, ...]
# ---------------------------------------------------------------------------
def _bn_head_kernel(h_ref, pk_ref, out_ref):
    h = h_ref[...].astype(jnp.float32)
    scale = pk_ref[0:1, :]
    shift = pk_ref[1:2, :]
    wd = pk_ref[2:3, :]
    bd = pk_ref[3:4, 0:1]

    a = jnp.maximum(h * scale + shift, 0.0)              # BN + ReLU
    d = jnp.sum(a * wd, axis=1, keepdims=True) + bd       # logit difference
    out_ref[:, 0:1] = jax.nn.sigmoid(d)
    out_ref[:, 1:2] = jax.nn.sigmoid(-d)


@functools.partial(jax.jit, static_argnames=("tb",))
def domain_classifier_forward(x, const, params, *, tb=1024):
    """Forward pass of Domain_Classifier.

    `const` only affects the backward pass (gradient reversal); the forward is
    an identity.  `tb` is the batch tile: ~512 on v5e, 1024-2048 on v6e/v7x.
    """
    del const  # Reverse_Grade.forward is an identity.
    B, F = x.shape
    assert F == IN_FEATURES, f"expected {IN_FEATURES} features, got {F}"

    # Batch tile: multiple of 8 sublanes, no larger than the padded batch.
    b8 = _round_up(B, 8)
    TB = max(8, (min(tb, b8) // 8) * 8)
    B_pad = _round_up(B, TB)
    n_steps = B_pad // TB

    # --- x path: cast to bf16 (no-op if already bf16), cheap row-pad only ---
    x_bf = x if x.dtype == jnp.bfloat16 else x.astype(jnp.bfloat16)
    if B_pad != B:
        x_bf = jnp.pad(x_bf, ((0, B_pad - B), (0, 0)))

    # --- W1: pad columns 100 -> 128 only (zero columns are inert), bf16 ---
    w1_p = jnp.pad(params["w1"].astype(jnp.bfloat16),
                   ((0, 0), (0, H_PAD - HIDDEN)))

    # ------------------------- phase 1: matmul + stats ----------------------
    grid1 = pltpu.PrefetchScalarGridSpec(
        num_scalar_prefetch=0,
        grid=(n_steps,),
        in_specs=[
            pl.BlockSpec((TB, IN_FEATURES), lambda i: (i, 0)),      # x streamed
            pl.BlockSpec((IN_FEATURES, H_PAD), lambda i: (0, 0)),   # W1 resident
        ],
        out_specs=[
            pl.BlockSpec((TB, H_PAD), lambda i: (i, 0)),            # h streamed
            pl.BlockSpec((2, H_PAD), lambda i: (0, 0)),             # sum / sumsq
        ],
    )
    cost1 = pl.CostEstimate(
        flops=2 * B_pad * IN_FEATURES * H_PAD + 4 * B_pad * H_PAD,
        transcendentals=0,
        bytes_accessed=(x_bf.size * 2 + w1_p.size * 2
                        + B_pad * H_PAD * 2 + 2 * H_PAD * 4),
    )
    h, stats = pl.pallas_call(
        _matmul_stats_kernel,
        out_shape=(jax.ShapeDtypeStruct((B_pad, H_PAD), jnp.bfloat16),
                   jax.ShapeDtypeStruct((2, H_PAD), jnp.float32)),
        grid_spec=grid1,
        compiler_params=pltpu.CompilerParams(
            dimension_semantics=("arbitrary",),   # stats accumulate over tiles
            vmem_limit_bytes=48 << 20,
        ),
        cost_estimate=cost1,
    )(x_bf, w1_p)

    # --- tiny (1, 128) math between phases: BN scale/shift + head packing ---
    def pad_h(v):
        v = jnp.asarray(v, jnp.float32).reshape(1, HIDDEN)
        return jnp.pad(v, ((0, 0), (0, H_PAD - HIDDEN)))

    inv_b = jnp.float32(1.0 / B)
    mean = stats[0:1, :] * inv_b
    var = jnp.maximum(stats[1:2, :] * inv_b - mean * mean, 0.0)
    rstd = jax.lax.rsqrt(var + BN_EPS)

    gamma = pad_h(params["gamma"])
    beta = pad_h(params["beta"])
    scale = gamma * rstd
    shift = beta - mean * scale

    w2 = jnp.asarray(params["w2"], jnp.float32)                 # [HIDDEN, 2]
    wd = pad_h((w2[:, 0] - w2[:, 1]).reshape(1, HIDDEN))
    b2 = jnp.asarray(params["b2"], jnp.float32).reshape(-1)     # [2]
    bd = b2[0] - b2[1]

    pk = jnp.zeros((8, H_PAD), jnp.float32)
    pk = pk.at[0].set(scale[0])
    pk = pk.at[1].set(shift[0])
    pk = pk.at[2].set(wd[0])
    pk = pk.at[3, 0].set(bd)

    # --------------------- phase 2: BN + ReLU + head + softmax --------------
    grid2 = pltpu.PrefetchScalarGridSpec(
        num_scalar_prefetch=0,
        grid=(n_steps,),
        in_specs=[
            pl.BlockSpec((TB, H_PAD), lambda i: (i, 0)),            # h streamed
            pl.BlockSpec((8, H_PAD), lambda i: (0, 0)),             # packed params
        ],
        out_specs=pl.BlockSpec((TB, NUM_CLASSES), lambda i: (i, 0)),
    )
    out = pl.pallas_call(
        _bn_head_kernel,
        out_shape=jax.ShapeDtypeStruct((B_pad, NUM_CLASSES), jnp.float32),
        grid_spec=grid2,
        compiler_params=pltpu.CompilerParams(
            dimension_semantics=("parallel",),
            vmem_limit_bytes=48 << 20,
        ),
    )(h, pk)

    return out[:B]


def init_params(key):
    """Deterministic synthetic params matching nn.Linear / nn.BatchNorm1d shapes."""
    k1, k2, k3, k4 = jax.random.split(key, 4)
    bound1 = 1.0 / (IN_FEATURES ** 0.5)
    bound2 = 1.0 / (HIDDEN ** 0.5)
    return {
        # Linear weights stored transposed ([in, out]) so the kernel does x @ W.
        "w1": jax.random.uniform(k1, (IN_FEATURES, HIDDEN), jnp.float32,
                                 -bound1, bound1),
        # b1 is kept for nn.Linear parity / the reference, but the kernel drops
        # it: a bias directly before training-mode BatchNorm cancels exactly.
        "b1": jax.random.uniform(k2, (1, HIDDEN), jnp.float32, -bound1, bound1),
        "gamma": jnp.ones((1, HIDDEN), jnp.float32),   # BatchNorm1d default weight
        "beta": jnp.zeros((1, HIDDEN), jnp.float32),   # BatchNorm1d default bias
        "w2": jax.random.uniform(k3, (HIDDEN, NUM_CLASSES), jnp.float32,
                                 -bound2, bound2),
        "b2": jax.random.uniform(k4, (1, NUM_CLASSES), jnp.float32,
                                 -bound2, bound2),
    }


def reference_forward(x, params):
    """Pure-JAX f32 reference (includes b1, two-pass BN stats, true softmax)."""
    h = x @ params["w1"] + params["b1"]
    mean = jnp.mean(h, axis=0, keepdims=True)
    var = jnp.mean((h - mean) ** 2, axis=0, keepdims=True)
    h = (h - mean) / jnp.sqrt(var + BN_EPS) * params["gamma"] + params["beta"]
    h = jnp.maximum(h, 0.0)
    logits = h @ params["w2"] + params["b2"]
    return jax.nn.softmax(logits, axis=1)


if __name__ == "__main__":
    key = jax.random.PRNGKey(0)
    kx, kp = jax.random.split(key)

    # Small demo shapes: B=12 with tb=8 exercises multi-step streaming AND the
    # zero-padded-batch-row path (B_pad = 16 != 12).
    B = 12
    x = jax.random.normal(kx, (B, IN_FEATURES), jnp.float32)
    const = 0.5  # gradient-reversal strength; unused in forward
    params = init_params(kp)

    out = domain_classifier_forward(x, const, params, tb=8)
    out = jax.block_until_ready(out)

    ref = reference_forward(x, params)
    assert out.shape == (B, NUM_CLASSES)
    # bf16 matmul inputs / bf16 h round-trip vs f32 reference: loose tolerance.
    assert jnp.allclose(out, ref, atol=1e-2, rtol=0.0), \
        float(jnp.max(jnp.abs(out - ref)))
    # rows of a softmax sum to 1
    assert jnp.allclose(jnp.sum(out, axis=1), jnp.ones((B,)), atol=1e-5)

    print("KERNEL_OK")
</pallas_src>

<mosaic_0001>
module attributes {stable_mosaic.version = 11 : i64} {
  func.func @_matmul_stats_kernel(%arg0: i32, %arg1: memref<8x2450xbf16, #tpu.memory_space<vmem>>, %arg2: memref<2450x128xbf16, #tpu.memory_space<vmem>>, %arg3: memref<8x128xbf16, #tpu.memory_space<vmem>>, %arg4: memref<2x128xf32, #tpu.memory_space<vmem>>) attributes {dimension_semantics = [#tpu.dimension_semantics<arbitrary>], iteration_bounds = array<i64: 2>, scalar_prefetch = 0 : i64, scratch_operands = 0 : i64, tpu.core_type = #tpu.core_type<tc>, window_params = [{transform_indices = @transform_0, window_bounds = array<i64: 8, 2450>}, {pipeline_mode = #tpu.pipeline_mode<synchronous>, transform_indices = @transform_1, window_bounds = array<i64: 2450, 128>}, {transform_indices = @transform_2, window_bounds = array<i64: 8, 128>}, {pipeline_mode = #tpu.pipeline_mode<synchronous>, transform_indices = @transform_3, window_bounds = array<i64: 2, 128>}]} {
    %c0 = arith.constant 0 : index
    %c0_0 = arith.constant 0 : index
    %0 = vector.load %arg1[%c0, %c0_0] : memref<8x2450xbf16, #tpu.memory_space<vmem>>, vector<8x2450xbf16>
    %c0_1 = arith.constant 0 : index
    %c0_2 = arith.constant 0 : index
    %1 = vector.load %arg2[%c0_1, %c0_2] : memref<2450x128xbf16, #tpu.memory_space<vmem>>, vector<2450x128xbf16>
    %cst = arith.constant dense<0.000000e+00> : vector<8x128xf32>
    %2 = tpu.matmul %0, %1, %cst {dimension_numbers = #tpu.dot_dimension_numbers<[1], [0], [0], [1], [0, 0, 1, 1], [], []>} : vector<8x2450xbf16>, vector<2450x128xbf16>, vector<8x128xf32> -> vector<8x128xf32>
    %c0_i32 = arith.constant 0 : i32
    %3 = arith.cmpi eq, %arg0, %c0_i32 : i32
    %4 = arith.extui %3 : i1 to i32
    %c0_i32_3 = arith.constant 0 : i32
    %5 = arith.cmpi ne, %4, %c0_i32_3 : i32
    scf.if %5 {
      %cst_15 = arith.constant 0.000000e+00 : f32
      %19 = vector.broadcast %cst_15 : f32 to vector<2x128xf32>
      %c0_16 = arith.constant 0 : index
      %c0_17 = arith.constant 0 : index
      %20 = vector.load %arg4[%c0_16, %c0_17] : memref<2x128xf32, #tpu.memory_space<vmem>>, vector<2x128xf32>
      tpu.vector_store %arg4[%c0_16, %c0_17], %19 {strides = array<i32>} : memref<2x128xf32, #tpu.memory_space<vmem>>, vector<2x128xf32>,
    } else {
    }
    %c0_4 = arith.constant 0 : index
    %c0_5 = arith.constant 0 : index
    %6 = vector.load %arg4[%c0_4, %c0_5] : memref<2x128xf32, #tpu.memory_space<vmem>>, vector<1x128xf32>
    %cst_6 = arith.constant dense<0.000000e+00> : vector<128xf32>
    %7 = vector.multi_reduction <add>, %2, %cst_6 [0] : vector<8x128xf32> to vector<128xf32>
    %8 = vector.shape_cast %7 : vector<128xf32> to vector<1x128xf32>
    %9 = arith.addf %6, %8 : vector<1x128xf32>
    %c0_7 = arith.constant 0 : index
    %c0_8 = arith.constant 0 : index
    %10 = vector.load %arg4[%c0_7, %c0_8] : memref<2x128xf32, #tpu.memory_space<vmem>>, vector<1x128xf32>
    tpu.vector_store %arg4[%c0_7, %c0_8], %9 {strides = array<i32>} : memref<2x128xf32, #tpu.memory_space<vmem>>, vector<1x128xf32>,
    %c1 = arith.constant 1 : index
    %c0_9 = arith.constant 0 : index
    %11 = vector.load %arg4[%c1, %c0_9] : memref<2x128xf32, #tpu.memory_space<vmem>>, vector<1x128xf32>
    %12 = arith.mulf %2, %2 : vector<8x128xf32>
    %cst_10 = arith.constant dense<0.000000e+00> : vector<128xf32>
    %13 = vector.multi_reduction <add>, %12, %cst_10 [0] : vector<8x128xf32> to vector<128xf32>
    %14 = vector.shape_cast %13 : vector<128xf32> to vector<1x128xf32>
    %15 = arith.addf %11, %14 : vector<1x128xf32>
    %c1_11 = arith.constant 1 : index
    %c0_12 = arith.constant 0 : index
    %16 = vector.load %arg4[%c1_11, %c0_12] : memref<2x128xf32, #tpu.memory_space<vmem>>, vector<1x128xf32>
    tpu.vector_store %arg4[%c1_11, %c0_12], %15 {strides = array<i32>} : memref<2x128xf32, #tpu.memory_space<vmem>>, vector<1x128xf32>,
    %17 = arith.truncf %2 : vector<8x128xf32> to vector<8x128xbf16>
    %c0_13 = arith.constant 0 : index
    %c0_14 = arith.constant 0 : index
    %18 = vector.load %arg3[%c0_13, %c0_14] : memref<8x128xbf16, #tpu.memory_space<vmem>>, vector<8x128xbf16>
    tpu.vector_store %arg3[%c0_13, %c0_14], %17 {strides = array<i32>} : memref<8x128xbf16, #tpu.memory_space<vmem>>, vector<8x128xbf16>,
    return
  }
  func.func @transform_0(%arg0: i32) -> (i32, i32) {
    %c0_i32 = arith.constant 0 : i32
    %c0_i32_0 = arith.constant 0 : i32
    return %arg0, %c0_i32 : i32, i32
  }
  func.func @transform_1(%arg0: i32) -> (i32, i32) {
    %c0_i32 = arith.constant 0 : i32
    %c0_i32_0 = arith.constant 0 : i32
    %c0_i32_1 = arith.constant 0 : i32
    return %c0_i32, %c0_i32_0 : i32, i32
  }
  func.func @transform_2(%arg0: i32) -> (i32, i32) {
    %c0_i32 = arith.constant 0 : i32
    %c0_i32_0 = arith.constant 0 : i32
    return %arg0, %c0_i32 : i32, i32
  }
  func.func @transform_3(%arg0: i32) -> (i32, i32) {
    %c0_i32 = arith.constant 0 : i32
    %c0_i32_0 = arith.constant 0 : i32
    %c0_i32_1 = arith.constant 0 : i32
    return %c0_i32, %c0_i32_0 : i32, i32
  }
}

module attributes {stable_mosaic.version = 11 : i64} {
  func.func @_bn_head_kernel(%arg0: i32, %arg1: memref<8x128xbf16, #tpu.memory_space<vmem>>, %arg2: memref<8x128xf32, #tpu.memory_space<vmem>>, %arg3: memref<8x2xf32, #tpu.memory_space<vmem>>) attributes {dimension_semantics = [#tpu.dimension_semantics<parallel>], iteration_bounds = array<i64: 2>, scalar_prefetch = 0 : i64, scratch_operands = 0 : i64, tpu.core_type = #tpu.core_type<tc>, window_params = [{transform_indices = @transform_0, window_bounds = array<i64: 8, 128>}, {pipeline_mode = #tpu.pipeline_mode<synchronous>, transform_indices = @transform_1, window_bounds = array<i64: 8, 128>}, {transform_indices = @transform_2, window_bounds = array<i64: 8, 2>}]} {
    %c0 = arith.constant 0 : index
    %c0_0 = arith.constant 0 : index
    %0 = vector.load %arg1[%c0, %c0_0] : memref<8x128xbf16, #tpu.memory_space<vmem>>, vector<8x128xbf16>
    %1 = arith.extf %0 : vector<8x128xbf16> to vector<8x128xf32>
    %c0_1 = arith.constant 0 : index
    %c0_2 = arith.constant 0 : index
    %2 = vector.load %arg2[%c0_1, %c0_2] : memref<8x128xf32, #tpu.memory_space<vmem>>, vector<1x128xf32>
    %c1 = arith.constant 1 : index
    %c0_3 = arith.constant 0 : index
    %3 = vector.load %arg2[%c1, %c0_3] : memref<8x128xf32, #tpu.memory_space<vmem>>, vector<1x128xf32>
    %c2 = arith.constant 2 : index
    %c0_4 = arith.constant 0 : index
    %4 = vector.load %arg2[%c2, %c0_4] : memref<8x128xf32, #tpu.memory_space<vmem>>, vector<1x128xf32>
    %c3 = arith.constant 3 : index
    %c0_5 = arith.constant 0 : index
    %5 = vector.load %arg2[%c3, %c0_5] : memref<8x128xf32, #tpu.memory_space<vmem>>, vector<1x1xf32>
    %6 = vector.broadcast %2 : vector<1x128xf32> to vector<8x128xf32>
    %7 = arith.mulf %1, %6 : vector<8x128xf32>
    %8 = vector.broadcast %3 : vector<1x128xf32> to vector<8x128xf32>
    %9 = arith.addf %7, %8 : vector<8x128xf32>
    %cst = arith.constant 0.000000e+00 : f32
    %10 = vector.broadcast %cst : f32 to vector<8x128xf32>
    %11 = arith.maximumf %9, %10 : vector<8x128xf32>
    %12 = vector.broadcast %4 : vector<1x128xf32> to vector<8x128xf32>
    %13 = arith.mulf %11, %12 : vector<8x128xf32>
    %cst_6 = arith.constant dense<0.000000e+00> : vector<8xf32>
    %14 = vector.multi_reduction <add>, %13, %cst_6 [1] : vector<8x128xf32> to vector<8xf32>
    %15 = vector.shape_cast %14 : vector<8xf32> to vector<8x1xf32>
    %16 = vector.broadcast %5 : vector<1x1xf32> to vector<8x1xf32>
    %17 = arith.addf %15, %16 : vector<8x1xf32>
    %18 = arith.negf %17 : vector<8x1xf32>
    %19 = math.exp %18 : vector<8x1xf32>
    %cst_7 = arith.constant 1.000000e+00 : f32
    %20 = vector.broadcast %cst_7 : f32 to vector<8x1xf32>
    %21 = arith.addf %20, %19 : vector<8x1xf32>
    %22 = arith.divf %20, %21 : vector<8x1xf32>
    %c0_8 = arith.constant 0 : index
    %c0_9 = arith.constant 0 : index
    %23 = vector.load %arg3[%c0_8, %c0_9] : memref<8x2xf32, #tpu.memory_space<vmem>>, vector<8x1xf32>
    tpu.vector_store %arg3[%c0_8, %c0_9], %22 {strides = array<i32>} : memref<8x2xf32, #tpu.memory_space<vmem>>, vector<8x1xf32>,
    %cst_10 = arith.constant 0.000000e+00 : f32
    %24 = vector.broadcast %cst_10 : f32 to vector<8x1xf32>
    %25 = arith.subf %24, %17 : vector<8x1xf32>
    %26 = arith.negf %25 : vector<8x1xf32>
    %27 = math.exp %26 : vector<8x1xf32>
    %cst_11 = arith.constant 1.000000e+00 : f32
    %28 = vector.broadcast %cst_11 : f32 to vector<8x1xf32>
    %29 = arith.addf %28, %27 : vector<8x1xf32>
    %30 = arith.divf %28, %29 : vector<8x1xf32>
    %c0_12 = arith.constant 0 : index
    %c1_13 = arith.constant 1 : index
    %31 = vector.load %arg3[%c0_12, %c1_13] : memref<8x2xf32, #tpu.memory_space<vmem>>, vector<8x1xf32>
    tpu.vector_store %arg3[%c0_12, %c1_13], %30 {strides = array<i32>} : memref<8x2xf32, #tpu.memory_space<vmem>>, vector<8x1xf32>,
    return
  }
  func.func @transform_0(%arg0: i32) -> (i32, i32) {
    %c0_i32 = arith.constant 0 : i32
    %c0_i32_0 = arith.constant 0 : i32
    return %arg0, %c0_i32 : i32, i32
  }
  func.func @transform_1(%arg0: i32) -> (i32, i32) {
    %c0_i32 = arith.constant 0 : i32
    %c0_i32_0 = arith.constant 0 : i32
    %c0_i32_1 = arith.constant 0 : i32
    return %c0_i32, %c0_i32_0 : i32, i32
  }
  func.func @transform_2(%arg0: i32) -> (i32, i32) {
    %c0_i32 = arith.constant 0 : i32
    %c0_i32_0 = arith.constant 0 : i32
    return %arg0, %c0_i32 : i32, i32
  }
}

</mosaic_0001>

<llo_original>
// kernel: domain_classifier_forward.3
$region0: #{domain_classifier_forward.3}
  #allocation0 [shape = 'u32[]', space=smem, size = 0x4, offset = 0x4, fixed_abs, tag = 'smem constant byte address 0x4 - core index']
  #allocation1 [shape = 'u32[144,128]{1,0:T(1,128)}', space=vmem, size = 0x12000, scoped, tag = 'internal scratch']
  %s0 = inlined_call_operand.vmem [shape: bf16[16,128], index: 0, kind: input, shape index: {}]
  %s1 = inlined_call_operand.vmem [shape: f32[8,128], index: 1, kind: input, shape index: {}]
  %s2 = inlined_call_operand.vmem [shape: f32[16,2], index: 2, kind: output, shape index: {}]
  %s3 = sld [smem:[#allocation0]]
  $region41: #{domain_classifier_forward.3} parent=0
    _
  %s5 = ssub.s32 1, %s3
  %s6 = scalar_select 0, %s5, %s3
  loop: start=0, step=1, limit=4
  $region2: #{domain_classifier_forward.3} parent=0 // loop_pre_header
    _
  $region3: #{domain_classifier_forward.3} parent=0 // loop_header
    %s8 = sphi 0, %s12
    %p9 = scmp.ge.s32.totalorder %s8, 4
    %s18 = sphi 0, %s20
    %s21 = sphi 0, %s18
    %s22 = sphi 0, %s21
    %s38 = sphi 0, %s22
    %s42 = sphi 0, %s42
    %s44 = sphi 0, %s42
    %s45 = sphi 0, %s44
    %s59 = sphi 0, %s45
    %s65 = sphi 0, %s67
    %s68 = sphi 0, %s65
    %s69 = sphi 0, %s68
    %s85 = sphi 0, %s69
  $region4: #{domain_classifier_forward.3} parent=0 // loop_header_branch
    %11 = sbr.rel (%p9) target = $region8
  $region5: #{domain_classifier_forward.3} parent=0 // loop_body
    %s13 = ssub.s32 %s8, 1
    %s14 = ssub.s32 %s8, 2
    %s15 = sadd.s32 %s8, 1
    %s16 = ssub.s32 %s8, %s15
    %p17 = scmp.eq.s32.totalorder %s16, 0
    %s19 = sadd.s32 %s18, 1
    %s20 = scalar_select %p17, %s18, %s19
    %p23 = pneg %p17
    %p24 = scmp.eq.s32.totalorder %s8, 1
    %p25 = por %p23, %p24
    %p26 = scmp.ne.s32.totalorder %s18, %s21
    %p27 = scmp.eq.s32.totalorder %s8, 0
    %p28 = por %p26, %p27
    %p29 = scmp.ne.s32.totalorder %s18, %s21
    %p30 = scmp.eq.s32.totalorder %s13, 1
    %p31 = por %p29, %p30
    %p32 = scmp.ne.s32.totalorder %s21, %s22
    %p33 = scmp.eq.s32.totalorder %s13, 0
    %p34 = por %p32, %p33
    %p35 = scmp.ne.s32.totalorder %s21, %s22
    %p36 = scmp.eq.s32.totalorder %s14, 1
    %p37 = por %p35, %p36
    %p39 = scmp.ne.s32.totalorder %s22, %s38
    %p40 = scmp.eq.s32.totalorder %s14, 0
    %p41 = por %p39, %p40
    %s43 = sadd.s32 %s42, 1
    %p46 = scmp.eq.s32.totalorder %s8, 1
    %p47 = scmp.ne.s32.totalorder %s42, %s44
    %p48 = scmp.eq.s32.totalorder %s8, 0
    %p49 = por %p47, %p48
    %p50 = scmp.ne.s32.totalorder %s42, %s44
    %p51 = scmp.eq.s32.totalorder %s13, 1
    %p52 = por %p50, %p51
    %p53 = scmp.ne.s32.totalorder %s44, %s45
    %p54 = scmp.eq.s32.totalorder %s13, 0
    %p55 = por %p53, %p54
    %p56 = scmp.ne.s32.totalorder %s44, %s45
    %p57 = scmp.eq.s32.totalorder %s14, 1
    %p58 = por %p56, %p57
    %p60 = scmp.ne.s32.totalorder %s45, %s59
    %p61 = scmp.eq.s32.totalorder %s14, 0
    %p62 = por %p60, %p61
    %s63 = ssub.s32 %s8, %s15
    %p64 = scmp.eq.s32.totalorder %s63, 0
    %s66 = sadd.s32 %s65, 1
    %s67 = scalar_select %p64, %s65, %s66
    %p70 = pneg %p64
    %p71 = scmp.eq.s32.totalorder %s8, 1
    %p72 = por %p70, %p71
    %p73 = scmp.ne.s32.totalorder %s65, %s68
    %p74 = scmp.eq.s32.totalorder %s8, 0
    %p75 = por %p73, %p74
    %p76 = scmp.ne.s32.totalorder %s65, %s68
    %p77 = scmp.eq.s32.totalorder %s13, 1
    %p78 = por %p76, %p77
    %p79 = scmp.ne.s32.totalorder %s68, %s69
    %p80 = scmp.eq.s32.totalorder %s13, 0
    %p81 = por %p79, %p80
    %p82 = scmp.ne.s32.totalorder %s68, %s69
    %p83 = scmp.eq.s32.totalorder %s14, 1
    %p84 = por %p82, %p83
    %p86 = scmp.ne.s32.totalorder %s69, %s85
    %p87 = scmp.eq.s32.totalorder %s14, 0
    %p88 = por %p86, %p87
    %p89 = scmp.le.s32.totalorder 1, %s8
    %p90 = scmp.lt.s32.totalorder %s8, 3
    %p91 = pnand %p89, %p90
    %p92 = pneg %p91
    // Predicated region
    $region9: #{domain_classifier_forward.3} parent=5 // pred_check
      _
    $region10: #{domain_classifier_forward.3} parent=5 // pred_check_branch
      %94 = sbr.rel (%p91) target = $region12
    $region11: #{domain_classifier_forward.3} parent=5 // pred_region
      %s95 = ssub.s32 %s8, 1
      // Predicated region
      $region13: #{domain_classifier_forward.3} parent=11 // pred_check
        %p96 = pneg %p55
      $region14: #{domain_classifier_forward.3} parent=11 // pred_check_branch
        %98 = sbr.rel (%p96) target = $region16
      $region15: #{domain_classifier_forward.3} parent=11 // pred_region
        _
      $region16: #{domain_classifier_forward.3} parent=11 // pred_fallthru
        _
    $region12: #{domain_classifier_forward.3} parent=5 // pred_fallthru
      _
    %p99 = scmp.lt.s32.totalorder %s8, 2
    // Predicated region
    $region17: #{domain_classifier_forward.3} parent=5 // pred_check
      %p100 = pneg %p99
    $region18: #{domain_classifier_forward.3} parent=5 // pred_check_branch
      %102 = sbr.rel (%p100) target = $region20
    $region19: #{domain_classifier_forward.3} parent=5 // pred_region
      // Predicated region
      $region21: #{domain_classifier_forward.3} parent=19 // pred_check
        %p103 = pneg %p28
      $region22: #{domain_classifier_forward.3} parent=19 // pred_check_branch
        %105 = sbr.rel (%p103) target = $region24
      $region23: #{domain_classifier_forward.3} parent=19 // pred_region
        %p106 = scmp.lt.s32.totalorder %s8, 1
        %s107 = scalar_select %p106, %s8, 1
        %s108 = smul.addr %s107, 4
        %s109 = scalar_lea.vmem %s0, %s108
      $region24: #{domain_classifier_forward.3} parent=19 // pred_fallthru
        _
    $region20: #{domain_classifier_forward.3} parent=5 // pred_fallthru
      _
    %p110 = scmp.le.s32.totalorder 1, %s8
    %p111 = scmp.lt.s32.totalorder %s8, 3
    %p112 = pnand %p110, %p111
    %p113 = pneg %p112
    // Predicated region
    $region25: #{domain_classifier_forward.3} parent=5 // pred_check
      _
    $region26: #{domain_classifier_forward.3} parent=5 // pred_check_branch
      %115 = sbr.rel (%p112) target = $region28
    $region27: #{domain_classifier_forward.3} parent=5 // pred_region
      %s116 = ssub.s32 %s8, 1
      %p117 = scmp.lt.s32.totalorder %s13, 1
      %s118 = scalar_select %p117, %s13, 1
      %s119 = smul.addr %s118, 4
      %s120 = scalar_lea.vmem %s0, %s119
      %p121 = pneg %p34
      %p122 = pneg %p31
      %p123 = pneg %p55
      %p124 = pneg %p52
      %p125 = pneg %p81
      %p126 = pneg %p78
      %p127 = scmp.lt.s32.totalorder %s13, 1
      %s128 = scalar_select %p127, %s13, 1
      %s129 = smul.addr %s128, 8
      %s130 = scalar_lea.vmem %s2, %s129
      %p131 = scmp.lt.s32.totalorder %s13, 1
      %s132 = scalar_select %p131, %s13, 1
      %s133 = smul.addr %s132, 4
      %s134 = scalar_lea.vmem %s0, %s133
      %p135 = scmp.lt.s32.totalorder %s13, 1
      %s136 = scalar_select %p135, %s13, 1
      %s137 = smul.addr %s136, 8
      %s138 = scalar_lea.vmem %s2, %s137
      %v139 = vld [vmem:[%s134] sm:$0xf]
      %v140 = vunpack.c.l.bf16 %v139
      %v141 = vld [vmem:[%s1] sm:$0x1]
      %v142 = vld [vmem:[%s1 + $0x1] sm:$0x1]
      %v143 = vld [vmem:[%s1 + $0x2] sm:$0x1]
      %v144 = vld [vmem:[%s1 + $0x3] sm:$0x1]
      %v145 = vlaneseq
      %v146 = vshrl.u32 %v145, 7
      %v147 = vsub.s32 0, %v146
      %v148 = vrot.slane %v141, %v147
      %v149 = vmul.f32 %v140, %v148
      %v150 = vlaneseq
      %v151 = vshrl.u32 %v150, 7
      %v152 = vsub.s32 0, %v151
      %v153 = vrot.slane %v142, %v152
      %v154 = vadd.f32 %v149, %v153
      %v155 = vmax.f32 %v154, 0.0
      %v156 = vlaneseq
      %v157 = vshrl.u32 %v156, 7
      %v158 = vsub.s32 0, %v157
      %v159 = vrot.slane %v143, %v158
      %v160 = vmul.f32 %v155, %v159
      %161 = vadd.xlane.f32.xlu0 %v160
      %v162 = vpop.xlane.xlu0 %161
      %v163 = vlaneseq
      %v164 = vshrl.u32 %v163, 7
      %v165 = vsub.s32 0, %v164
      %v166 = vrot.slane %v144, %v165
      %v167 = vadd.f32 %v162, %v166
      %v168 = vxor.u32 %v167, 2147483648
      %v169 = vmul.f32 %v168, 1.442695
      %v170 = vpow.pop %v169
      %v171 = vadd.f32 %v170, 1.0
      %v172 = vrcp.pop %v171
      %v173 = vmul.f32 1.0, %v172
      %vm174 = vcmask 7168
      %175 = vst.msk [vmem:[%s138] sm:$0xff] %vm174, %v173
      %v176 = vsub.f32 0.0, %v167
      %v177 = vxor.u32 %v176, 2147483648
      %v178 = vmul.f32 %v177, 1.442695
      %v179 = vpow.pop %v178
      %v180 = vadd.f32 %v179, 1.0
      %v181 = vrcp.pop %v180
      %v182 = vmul.f32 1.0, %v181
      %184 = vrot.lane.b32.xlu0 %v182, 1
      %v185 = vpop.permute.xlu0 %184
      %vm187 = vcmask 15368
      %188 = vst.msk [vmem:[%s138] sm:$0xff] %vm187, %v185
      %p189 = scmp.lt.s32.totalorder %s13, 1
      %s190 = scalar_select %p189, %s13, 1
      %s191 = smul.addr %s190, 8
      %s192 = scalar_lea.vmem %s2, %s191
      // Predicated region
      $region29: #{domain_classifier_forward.3} parent=27 // pred_check
        %p193 = pneg %p78
      $region30: #{domain_classifier_forward.3} parent=27 // pred_check_branch
        %195 = sbr.rel (%p193) target = $region32
      $region31: #{domain_classifier_forward.3} parent=27 // pred_region
        _
      $region32: #{domain_classifier_forward.3} parent=27 // pred_fallthru
        _
    $region28: #{domain_classifier_forward.3} parent=5 // pred_fallthru
      _
    %p196 = scmp.le.s32.totalorder 2, %s8
    // Predicated region
    $region33: #{domain_classifier_forward.3} parent=5 // pred_check
      %p197 = pneg %p196
    $region34: #{domain_classifier_forward.3} parent=5 // pred_check_branch
      %199 = sbr.rel (%p197) target = $region36
    $region35: #{domain_classifier_forward.3} parent=5 // pred_region
      %s200 = ssub.s32 %s8, 2
      // Predicated region
      $region37: #{domain_classifier_forward.3} parent=35 // pred_check
        %p201 = pneg %p84
      $region38: #{domain_classifier_forward.3} parent=35 // pred_check_branch
        %203 = sbr.rel (%p201) target = $region40
      $region39: #{domain_classifier_forward.3} parent=35 // pred_region
        %p204 = scmp.lt.s32.totalorder %s14, 1
        %s205 = scalar_select %p204, %s14, 1
        %s206 = smul.addr %s205, 8
        %s207 = scalar_lea.vmem %s2, %s206
      $region40: #{domain_classifier_forward.3} parent=35 // pred_fallthru
        _
    $region36: #{domain_classifier_forward.3} parent=5 // pred_fallthru
      _
  $region6: #{domain_classifier_forward.3} parent=0 // loop_footer
    %s12 = sadd.s32 1, %s8
  $region7: #{domain_classifier_forward.3} parent=0 // loop_footer_branch
    %7 = sbr.rel target = $region3
  $region8: #{domain_classifier_forward.3} parent=0 // loop_exit
    _

// kernel: domain_classifier_forward.2
$region0: #{domain_classifier_forward.2}
  #allocation0 [shape = 'u32[]', space=smem, size = 0x4, offset = 0x4, fixed_abs, tag = 'smem constant byte address 0x4 - core index']
  #allocation1 [shape = 'u32[144,128]{1,0:T(1,128)}', space=vmem, size = 0x12000, scoped, tag = 'internal scratch']
  %s0 = inlined_call_operand.vmem [shape: bf16[16,2450], index: 0, kind: input, shape index: {}]
  %s1 = inlined_call_operand.vmem [shape: bf16[2450,128], index: 1, kind: input, shape index: {}]
  %s2 = inlined_call_operand.vmem [shape: bf16[16,128], index: 2, kind: output, shape index: {0}]
  %s3 = inlined_call_operand.vmem [shape: f32[2,128], index: 3, kind: output, shape index: {1}]
  %4 = xla_tuple %s2, %s3
  %s5 = sld [smem:[#allocation0]]
  $region53: #{domain_classifier_forward.2} parent=0
    _
  %s7 = ssub.s32 1, %s5
  %s8 = scalar_select 0, %s7, %s5
  loop: start=0, step=1, limit=4
  $region2: #{domain_classifier_forward.2} parent=0 // loop_pre_header
    _
  $region3: #{domain_classifier_forward.2} parent=0 // loop_header
    %s10 = sphi 0, %s14
    %p11 = scmp.ge.s32.totalorder %s10, 4
    %s20 = sphi 0, %s22
    %s23 = sphi 0, %s20
    %s24 = sphi 0, %s23
    %s40 = sphi 0, %s24
    %s44 = sphi 0, %s44
    %s46 = sphi 0, %s44
    %s47 = sphi 0, %s46
    %s61 = sphi 0, %s47
    %s67 = sphi 0, %s69
    %s70 = sphi 0, %s67
    %s71 = sphi 0, %s70
    %s87 = sphi 0, %s71
    %s91 = sphi 0, %s91
    %s93 = sphi 0, %s91
    %s94 = sphi 0, %s93
    %s108 = sphi 0, %s94
  $region4: #{domain_classifier_forward.2} parent=0 // loop_header_branch
    %13 = sbr.rel (%p11) target = $region8
  $region5: #{domain_classifier_forward.2} parent=0 // loop_body
    %s15 = ssub.s32 %s10, 1
    %s16 = ssub.s32 %s10, 2
    %s17 = sadd.s32 %s10, 1
    %s18 = ssub.s32 %s10, %s17
    %p19 = scmp.eq.s32.totalorder %s18, 0
    %s21 = sadd.s32 %s20, 1
    %s22 = scalar_select %p19, %s20, %s21
    %p25 = pneg %p19
    %p26 = scmp.eq.s32.totalorder %s10, 1
    %p27 = por %p25, %p26
    %p28 = scmp.ne.s32.totalorder %s20, %s23
    %p29 = scmp.eq.s32.totalorder %s10, 0
    %p30 = por %p28, %p29
    %p31 = scmp.ne.s32.totalorder %s20, %s23
    %p32 = scmp.eq.s32.totalorder %s15, 1
    %p33 = por %p31, %p32
    %p34 = scmp.ne.s32.totalorder %s23, %s24
    %p35 = scmp.eq.s32.totalorder %s15, 0
    %p36 = por %p34, %p35
    %p37 = scmp.ne.s32.totalorder %s23, %s24
    %p38 = scmp.eq.s32.totalorder %s16, 1
    %p39 = por %p37, %p38
    %p41 = scmp.ne.s32.totalorder %s24, %s40
    %p42 = scmp.eq.s32.totalorder %s16, 0
    %p43 = por %p41, %p42
    %s45 = sadd.s32 %s44, 1
    %p48 = scmp.eq.s32.totalorder %s10, 1
    %p49 = scmp.ne.s32.totalorder %s44, %s46
    %p50 = scmp.eq.s32.totalorder %s10, 0
    %p51 = por %p49, %p50
    %p52 = scmp.ne.s32.totalorder %s44, %s46
    %p53 = scmp.eq.s32.totalorder %s15, 1
    %p54 = por %p52, %p53
    %p55 = scmp.ne.s32.totalorder %s46, %s47
    %p56 = scmp.eq.s32.totalorder %s15, 0
    %p57 = por %p55, %p56
    %p58 = scmp.ne.s32.totalorder %s46, %s47
    %p59 = scmp.eq.s32.totalorder %s16, 1
    %p60 = por %p58, %p59
    %p62 = scmp.ne.s32.totalorder %s47, %s61
    %p63 = scmp.eq.s32.totalorder %s16, 0
    %p64 = por %p62, %p63
    %s65 = ssub.s32 %s10, %s17
    %p66 = scmp.eq.s32.totalorder %s65, 0
    %s68 = sadd.s32 %s67, 1
    %s69 = scalar_select %p66, %s67, %s68
    %p72 = pneg %p66
    %p73 = scmp.eq.s32.totalorder %s10, 1
    %p74 = por %p72, %p73
    %p75 = scmp.ne.s32.totalorder %s67, %s70
    %p76 = scmp.eq.s32.totalorder %s10, 0
    %p77 = por %p75, %p76
    %p78 = scmp.ne.s32.totalorder %s67, %s70
    %p79 = scmp.eq.s32.totalorder %s15, 1
    %p80 = por %p78, %p79
    %p81 = scmp.ne.s32.totalorder %s70, %s71
    %p82 = scmp.eq.s32.totalorder %s15, 0
    %p83 = por %p81, %p82
    %p84 = scmp.ne.s32.totalorder %s70, %s71
    %p85 = scmp.eq.s32.totalorder %s16, 1
    %p86 = por %p84, %p85
    %p88 = scmp.ne.s32.totalorder %s71, %s87
    %p89 = scmp.eq.s32.totalorder %s16, 0
    %p90 = por %p88, %p89
    %s92 = sadd.s32 %s91, 1
    %p95 = scmp.eq.s32.totalorder %s10, 1
    %p96 = scmp.ne.s32.totalorder %s91, %s93
    %p97 = scmp.eq.s32.totalorder %s10, 0
    %p98 = por %p96, %p97
    %p99 = scmp.ne.s32.totalorder %s91, %s93
    %p100 = scmp.eq.s32.totalorder %s15, 1
    %p101 = por %p99, %p100
    %p102 = scmp.ne.s32.totalorder %s93, %s94
    %p103 = scmp.eq.s32.totalorder %s15, 0
    %p104 = por %p102, %p103
    %p105 = scmp.ne.s32.totalorder %s93, %s94
    %p106 = scmp.eq.s32.totalorder %s16, 1
    %p107 = por %p105, %p106
    %p109 = scmp.ne.s32.totalorder %s94, %s108
    %p110 = scmp.eq.s32.totalorder %s16, 0
    %p111 = por %p109, %p110
    %p112 = scmp.le.s32.totalorder 1, %s10
    %p113 = scmp.lt.s32.totalorder %s10, 3
    %p114 = pnand %p112, %p113
    %p115 = pneg %p114
    // Predicated region
    $region9: #{domain_classifier_forward.2} parent=5 // pred_check
      _
    $region10: #{domain_classifier_forward.2} parent=5 // pred_check_branch
      %117 = sbr.rel (%p114) target = $region12
    $region11: #{domain_classifier_forward.2} parent=5 // pred_region
      %s118 = ssub.s32 %s10, 1
      // Predicated region
      $region13: #{domain_classifier_forward.2} parent=11 // pred_check
        %p119 = pneg %p57
      $region14: #{domain_classifier_forward.2} parent=11 // pred_check_branch
        %121 = sbr.rel (%p119) target = $region16
      $region15: #{domain_classifier_forward.2} parent=11 // pred_region
        _
      $region16: #{domain_classifier_forward.2} parent=11 // pred_fallthru
        _
    $region12: #{domain_classifier_forward.2} parent=5 // pred_fallthru
      _
    %p122 = scmp.lt.s32.totalorder %s10, 2
    // Predicated region
    $region17: #{domain_classifier_forward.2} parent=5 // pred_check
      %p123 = pneg %p122
    $region18: #{domain_classifier_forward.2} parent=5 // pred_check_branch
      %125 = sbr.rel (%p123) target = $region20
    $region19: #{domain_classifier_forward.2} parent=5 // pred_region
      // Predicated region
      $region21: #{domain_classifier_forward.2} parent=19 // pred_check
        %p126 = pneg %p30
      $region22: #{domain_classifier_forward.2} parent=19 // pred_check_branch
        %128 = sbr.rel (%p126) target = $region24
      $region23: #{domain_classifier_forward.2} parent=19 // pred_region
        %p129 = scmp.lt.s32.totalorder %s10, 1
        %s130 = scalar_select %p129, %s10, 1
        %s131 = smul.addr %s130, 20
        %s132 = smul.addr %s131, 4
        %s133 = scalar_lea.vmem %s0, %s132
      $region24: #{domain_classifier_forward.2} parent=19 // pred_fallthru
        _
    $region20: #{domain_classifier_forward.2} parent=5 // pred_fallthru
      _
    %p134 = scmp.le.s32.totalorder 1, %s10
    %p135 = scmp.lt.s32.totalorder %s10, 3
    %p136 = pnand %p134, %p135
    %p137 = pneg %p136
    // Predicated region
    $region25: #{domain_classifier_forward.2} parent=5 // pred_check
      _
    $region26: #{domain_classifier_forward.2} parent=5 // pred_check_branch
      %139 = sbr.rel (%p136) target = $region28
    $region27: #{domain_classifier_forward.2} parent=5 // pred_region
      %s140 = ssub.s32 %s10, 1
      %p141 = scmp.lt.s32.totalorder %s15, 1
      %s142 = scalar_select %p141, %s15, 1
      %s143 = smul.addr %s142, 20
      %s144 = smul.addr %s143, 4
      %s145 = scalar_lea.vmem %s0, %s144
      %p146 = pneg %p36
      %p147 = pneg %p33
      %p148 = pneg %p57
      %p149 = pneg %p54
      %p150 = pneg %p83
      %p151 = pneg %p80
      %p152 = scmp.lt.s32.totalorder %s15, 1
      %s153 = scalar_select %p152, %s15, 1
      %s154 = smul.addr %s153, 4
      %s155 = scalar_lea.vmem %s2, %s154
      %p156 = pneg %p104
      %p157 = pneg %p101
      %p158 = scmp.lt.s32.totalorder %s15, 1
      %s159 = scalar_select %p158, %s15, 1
      %s160 = smul.addr %s159, 20
      %s161 = smul.addr %s160, 4
      %s162 = scalar_lea.vmem %s0, %s161
      %p163 = scmp.lt.s32.totalorder %s15, 1
      %s164 = scalar_select %p163, %s15, 1
      %s165 = smul.addr %s164, 4
      %s166 = scalar_lea.vmem %s2, %s165
      %v168 = vld [vmem:[%s162] sm:$0xff]
      %v169 = vld [vmem:[%s162 + $0x8] sm:$0xff]
      %v170 = vld [vmem:[%s162 + $0x10] sm:$0xff]
      %v171 = vld [vmem:[%s162 + $0x18] sm:$0xff]
      %v172 = vld [vmem:[%s162 + $0x20] sm:$0xff]
      %v173 = vld [vmem:[%s162 + $0x28] sm:$0xff]
      %v174 = vld [vmem:[%s162 + $0x30] sm:$0xff]
      %v175 = vld [vmem:[%s162 + $0x38] sm:$0xff]
      %v176 = vld [vmem:[%s162 + $0x40] sm:$0xff]
      %v177 = vld [vmem:[%s162 + $0x48] sm:$0xff]
      %v178 = vld [vmem:[%s1] sm:$0xf]
      %v179 = vld [vmem:[%s1 + $0x4] sm:$0xf]
      %v180 = vld [vmem:[%s1 + $0x8] sm:$0xf]
      %v181 = vld [vmem:[%s1 + $0xc] sm:$0xf]
      %v182 = vld [vmem:[%s1 + $0x10] sm:$0xf]
      %v183 = vld [vmem:[%s1 + $0x14] sm:$0xf]
      %v184 = vld [vmem:[%s1 + $0x18] sm:$0xf]
      %v185 = vld [vmem:[%s1 + $0x1c] sm:$0xf]
      %v186 = vld [vmem:[%s1 + $0x20] sm:$0xf]
      %v187 = vld [vmem:[%s1 + $0x24] sm:$0xf]
      %v188 = vld [vmem:[%s1 + $0x28] sm:$0xf]
      %v189 = vld [vmem:[%s1 + $0x2c] sm:$0xf]
      %v190 = vld [vmem:[%s1 + $0x30] sm:$0xf]
      %v191 = vld [vmem:[%s1 + $0x34] sm:$0xf]
      %v192 = vld [vmem:[%s1 + $0x38] sm:$0xf]
      %v193 = vld [vmem:[%s1 + $0x3c] sm:$0xf]
      %v194 = vld [vmem:[%s1 + $0x40] sm:$0xf]
      %v195 = vld [vmem:[%s1 + $0x44] sm:$0xf]
      %v196 = vld [vmem:[%s1 + $0x48] sm:$0xf]
      %v197 = vld [vmem:[%s1 + $0x4c] sm:$0xf]
      %v198 = vld [vmem:[%s1 + $0x50] sm:$0xf]
      %v199 = vld [vmem:[%s1 + $0x54] sm:$0xf]
      %v200 = vld [vmem:[%s1 + $0x58] sm:$0xf]
      %v201 = vld [vmem:[%s1 + $0x5c] sm:$0xf]
      %v202 = vld [vmem:[%s1 + $0x60] sm:$0xf]
      %v203 = vld [vmem:[%s1 + $0x64] sm:$0xf]
      %v204 = vld [vmem:[%s1 + $0x68] sm:$0xf]
      %v205 = vld [vmem:[%s1 + $0x6c] sm:$0xf]
      %v206 = vld [vmem:[%s1 + $0x70] sm:$0xf]
      %v207 = vld [vmem:[%s1 + $0x74] sm:$0xf]
      %v208 = vld [vmem:[%s1 + $0x78] sm:$0xf]
      %v209 = vld [vmem:[%s1 + $0x7c] sm:$0xf]
      %v210 = vld [vmem:[%s1 + $0x80] sm:$0xf]
      %v211 = vld [vmem:[%s1 + $0x84] sm:$0xf]
      %v212 = vld [vmem:[%s1 + $0x88] sm:$0xf]
      %v213 = vld [vmem:[%s1 + $0x8c] sm:$0xf]
      %v214 = vld [vmem:[%s1 + $0x90] sm:$0xf]
      %v215 = vld [vmem:[%s1 + $0x94] sm:$0xf]
      %v216 = vld [vmem:[%s1 + $0x98] sm:$0xf]
      %v217 = vld [vmem:[%s1 + $0x9c] sm:$0xf]
      %v218 = vld [vmem:[%s1 + $0xa0] sm:$0xf]
      %v219 = vld [vmem:[%s1 + $0xa4] sm:$0xf]
      %v220 = vld [vmem:[%s1 + $0xa8] sm:$0xf]
      %v221 = vld [vmem:[%s1 + $0xac] sm:$0xf]
      %v222 = vld [vmem:[%s1 + $0xb0] sm:$0xf]
      %v223 = vld [vmem:[%s1 + $0xb4] sm:$0xf]
      %v224 = vld [vmem:[%s1 + $0xb8] sm:$0xf]
      %v225 = vld [vmem:[%s1 + $0xbc] sm:$0xf]
      %v226 = vld [vmem:[%s1 + $0xc0] sm:$0xf]
      %v227 = vld [vmem:[%s1 + $0xc4] sm:$0xf]
      %v228 = vld [vmem:[%s1 + $0xc8] sm:$0xf]
      %v229 = vld [vmem:[%s1 + $0xcc] sm:$0xf]
      %v230 = vld [vmem:[%s1 + $0xd0] sm:$0xf]
      %v231 = vld [vmem:[%s1 + $0xd4] sm:$0xf]
      %v232 = vld [vmem:[%s1 + $0xd8] sm:$0xf]
      %v233 = vld [vmem:[%s1 + $0xdc] sm:$0xf]
      %v234 = vld [vmem:[%s1 + $0xe0] sm:$0xf]
      %v235 = vld [vmem:[%s1 + $0xe4] sm:$0xf]
      %v236 = vld [vmem:[%s1 + $0xe8] sm:$0xf]
      %v237 = vld [vmem:[%s1 + $0xec] sm:$0xf]
      %v238 = vld [vmem:[%s1 + $0xf0] sm:$0xf]
      %v239 = vld [vmem:[%s1 + $0xf4] sm:$0xf]
      %v240 = vld [vmem:[%s1 + $0xf8] sm:$0xf]
      %v241 = vld [vmem:[%s1 + $0xfc] sm:$0xf]
      %v242 = vld [vmem:[%s1 + $0x100] sm:$0xf]
      %v243 = vld [vmem:[%s1 + $0x104] sm:$0xf]
      %v244 = vld [vmem:[%s1 + $0x108] sm:$0xf]
      %v245 = vld [vmem:[%s1 + $0x10c] sm:$0xf]
      %v246 = vld [vmem:[%s1 + $0x110] sm:$0xf]
      %v247 = vld [vmem:[%s1 + $0x114] sm:$0xf]
      %v248 = vld [vmem:[%s1 + $0x118] sm:$0xf]
      %v249 = vld [vmem:[%s1 + $0x11c] sm:$0xf]
      %v250 = vld [vmem:[%s1 + $0x120] sm:$0xf]
      %v251 = vld [vmem:[%s1 + $0x124] sm:$0xf]
      %v252 = vld [vmem:[%s1 + $0x128] sm:$0xf]
      %v253 = vld [vmem:[%s1 + $0x12c] sm:$0xf]
      %v254 = vld [vmem:[%s1 + $0x130] sm:$0xf]
      %v255 = vld [vmem:[%s1 + $0x134] sm:$0xf]
      %v256 = vld [vmem:[%s1 + $0x138] sm:$0xf]
      %v257 = vld [vmem:[%s1 + $0x13c] sm:$0xf]
      %v258 = vld [vmem:[%s1 + $0x140] sm:$0xf]
      %v259 = vld [vmem:[%s1 + $0x144] sm:$0xf]
      %v260 = vld [vmem:[%s1 + $0x148] sm:$0xf]
      %v261 = vld [vmem:[%s1 + $0x14c] sm:$0xf]
      %v262 = vld [vmem:[%s1 + $0x150] sm:$0xf]
      %v263 = vld [vmem:[%s1 + $0x154] sm:$0xf]
      %v264 = vld [vmem:[%s1 + $0x158] sm:$0xf]
      %v265 = vld [vmem:[%s1 + $0x15c] sm:$0xf]
      %v266 = vld [vmem:[%s1 + $0x160] sm:$0xf]
      %v267 = vld [vmem:[%s1 + $0x164] sm:$0xf]
      %v268 = vld [vmem:[%s1 + $0x168] sm:$0xf]
      %v269 = vld [vmem:[%s1 + $0x16c] sm:$0xf]
      %v270 = vld [vmem:[%s1 + $0x170] sm:$0xf]
      %v271 = vld [vmem:[%s1 + $0x174] sm:$0xf]
      %v272 = vld [vmem:[%s1 + $0x178] sm:$0xf]
      %v273 = vld [vmem:[%s1 + $0x17c] sm:$0xf]
      %v274 = vld [vmem:[%s1 + $0x180] sm:$0xf]
      %v275 = vld [vmem:[%s1 + $0x184] sm:$0xf]
      %v276 = vld [vmem:[%s1 + $0x188] sm:$0xf]
      %v277 = vld [vmem:[%s1 + $0x18c] sm:$0xf]
      %v278 = vld [vmem:[%s1 + $0x190] sm:$0xf]
      %v279 = vld [vmem:[%s1 + $0x194] sm:$0xf]
      %v280 = vld [vmem:[%s1 + $0x198] sm:$0xf]
      %v281 = vld [vmem:[%s1 + $0x19c] sm:$0xf]
      %v282 = vld [vmem:[%s1 + $0x1a0] sm:$0xf]
      %v283 = vld [vmem:[%s1 + $0x1a4] sm:$0xf]
      %v284 = vld [vmem:[%s1 + $0x1a8] sm:$0xf]
      %v285 = vld [vmem:[%s1 + $0x1ac] sm:$0xf]
      %v286 = vld [vmem:[%s1 + $0x1b0] sm:$0xf]
      %v287 = vld [vmem:[%s1 + $0x1b4] sm:$0xf]
      %v288 = vld [vmem:[%s1 + $0x1b8] sm:$0xf]
      %v289 = vld [vmem:[%s1 + $0x1bc] sm:$0xf]
      %v290 = vld [vmem:[%s1 + $0x1c0] sm:$0xf]
      %v291 = vld [vmem:[%s1 + $0x1c4] sm:$0xf]
      %v292 = vld [vmem:[%s1 + $0x1c8] sm:$0xf]
      %v293 = vld [vmem:[%s1 + $0x1cc] sm:$0xf]
      %v294 = vld [vmem:[%s1 + $0x1d0] sm:$0xf]
      %v295 = vld [vmem:[%s1 + $0x1d4] sm:$0xf]
      %v296 = vld [vmem:[%s1 + $0x1d8] sm:$0xf]
      %v297 = vld [vmem:[%s1 + $0x1dc] sm:$0xf]
      %v298 = vld [vmem:[%s1 + $0x1e0] sm:$0xf]
      %v299 = vld [vmem:[%s1 + $0x1e4] sm:$0xf]
      %v300 = vld [vmem:[%s1 + $0x1e8] sm:$0xf]
      %v301 = vld [vmem:[%s1 + $0x1ec] sm:$0xf]
      %v302 = vld [vmem:[%s1 + $0x1f0] sm:$0xf]
      %v303 = vld [vmem:[%s1 + $0x1f4] sm:$0xf]
      %v304 = vld [vmem:[%s1 + $0x1f8] sm:$0xf]
      %v305 = vld [vmem:[%s1 + $0x1fc] sm:$0xf]
      %v306 = vld [vmem:[%s1 + $0x200] sm:$0xf]
      %v307 = vld [vmem:[%s1 + $0x204] sm:$0xf]
      %v308 = vld [vmem:[%s1 + $0x208] sm:$0xf]
      %v309 = vld [vmem:[%s1 + $0x20c] sm:$0xf]
      %v310 = vld [vmem:[%s1 + $0x210] sm:$0xf]
      %v311 = vld [vmem:[%s1 + $0x214] sm:$0xf]
      %v312 = vld [vmem:[%s1 + $0x218] sm:$0xf]
      %v313 = vld [vmem:[%s1 + $0x21c] sm:$0xf]
      %v314 = vld [vmem:[%s1 + $0x220] sm:$0xf]
      %v315 = vld [vmem:[%s1 + $0x224] sm:$0xf]
      %v316 = vld [vmem:[%s1 + $0x228] sm:$0xf]
      %v317 = vld [vmem:[%s1 + $0x22c] sm:$0xf]
      %v318 = vld [vmem:[%s1 + $0x230] sm:$0xf]
      %v319 = vld [vmem:[%s1 + $0x234] sm:$0xf]
      %v320 = vld [vmem:[%s1 + $0x238] sm:$0xf]
      %v321 = vld [vmem:[%s1 + $0x23c] sm:$0xf]
      %v322 = vld [vmem:[%s1 + $0x240] sm:$0xf]
      %v323 = vld [vmem:[%s1 + $0x244] sm:$0xf]
      %v324 = vld [vmem:[%s1 + $0x248] sm:$0xf]
      %v325 = vld [vmem:[%s1 + $0x24c] sm:$0xf]
      %v326 = vld [vmem:[%s1 + $0x250] sm:$0xf]
      %v327 = vld [vmem:[%s1 + $0x254] sm:$0xf]
      %v328 = vld [vmem:[%s1 + $0x258] sm:$0xf]
      %v329 = vld [vmem:[%s1 + $0x25c] sm:$0xf]
      %v330 = vld [vmem:[%s1 + $0x260] sm:$0xf]
      %v331 = vld [vmem:[%s1 + $0x264] sm:$0xf]
      %v332 = vld [vmem:[%s1 + $0x268] sm:$0xf]
      %v333 = vld [vmem:[%s1 + $0x26c] sm:$0xf]
      %v334 = vld [vmem:[%s1 + $0x270] sm:$0xf]
      %v335 = vld [vmem:[%s1 + $0x274] sm:$0xf]
      %v336 = vld [vmem:[%s1 + $0x278] sm:$0xf]
      %v337 = vld [vmem:[%s1 + $0x27c] sm:$0xf]
      %v338 = vld [vmem:[%s1 + $0x280] sm:$0xf]
      %v339 = vld [vmem:[%s1 + $0x284] sm:$0xf]
      %v340 = vld [vmem:[%s1 + $0x288] sm:$0xf]
      %v341 = vld [vmem:[%s1 + $0x28c] sm:$0xf]
      %v342 = vld [vmem:[%s1 + $0x290] sm:$0xf]
      %v343 = vld [vmem:[%s1 + $0x294] sm:$0xf]
      %v344 = vld [vmem:[%s1 + $0x298] sm:$0xf]
      %v345 = vld [vmem:[%s1 + $0x29c] sm:$0xf]
      %v346 = vld [vmem:[%s1 + $0x2a0] sm:$0xf]
      %v347 = vld [vmem:[%s1 + $0x2a4] sm:$0xf]
      %v348 = vld [vmem:[%s1 + $0x2a8] sm:$0xf]
      %v349 = vld [vmem:[%s1 + $0x2ac] sm:$0xf]
      %v350 = vld [vmem:[%s1 + $0x2b0] sm:$0xf]
      %v351 = vld [vmem:[%s1 + $0x2b4] sm:$0xf]
      %v352 = vld [vmem:[%s1 + $0x2b8] sm:$0xf]
      %v353 = vld [vmem:[%s1 + $0x2bc] sm:$0xf]
      %v354 = vld [vmem:[%s1 + $0x2c0] sm:$0xf]
      %v355 = vld [vmem:[%s1 + $0x2c4] sm:$0xf]
      %v356 = vld [vmem:[%s1 + $0x2c8] sm:$0xf]
      %v357 = vld [vmem:[%s1 + $0x2cc] sm:$0xf]
      %v358 = vld [vmem:[%s1 + $0x2d0] sm:$0xf]
      %v359 = vld [vmem:[%s1 + $0x2d4] sm:$0xf]
      %v360 = vld [vmem:[%s1 + $0x2d8] sm:$0xf]
      %v361 = vld [vmem:[%s1 + $0x2dc] sm:$0xf]
      %v362 = vld [vmem:[%s1 + $0x2e0] sm:$0xf]
      %v363 = vld [vmem:[%s1 + $0x2e4] sm:$0xf]
      %v364 = vld [vmem:[%s1 + $0x2e8] sm:$0xf]
      %v365 = vld [vmem:[%s1 + $0x2ec] sm:$0xf]
      %v366 = vld [vmem:[%s1 + $0x2f0] sm:$0xf]
      %v367 = vld [vmem:[%s1 + $0x2f4] sm:$0xf]
      %v368 = vld [vmem:[%s1 + $0x2f8] sm:$0xf]
      %v369 = vld [vmem:[%s1 + $0x2fc] sm:$0xf]
      %v370 = vld [vmem:[%s1 + $0x300] sm:$0xf]
      %v371 = vld [vmem:[%s1 + $0x304] sm:$0xf]
      %v372 = vld [vmem:[%s1 + $0x308] sm:$0xf]
      %v373 = vld [vmem:[%s1 + $0x30c] sm:$0xf]
      %v374 = vld [vmem:[%s1 + $0x310] sm:$0xf]
      %v375 = vld [vmem:[%s1 + $0x314] sm:$0xf]
      %v376 = vld [vmem:[%s1 + $0x318] sm:$0xf]
      %v377 = vld [vmem:[%s1 + $0x31c] sm:$0xf]
      %v378 = vld [vmem:[%s1 + $0x320] sm:$0xf]
      %v379 = vld [vmem:[%s1 + $0x324] sm:$0xf]
      %v380 = vld [vmem:[%s1 + $0x328] sm:$0xf]
      %v381 = vld [vmem:[%s1 + $0x32c] sm:$0xf]
      %v382 = vld [vmem:[%s1 + $0x330] sm:$0xf]
      %v383 = vld [vmem:[%s1 + $0x334] sm:$0xf]
      %v384 = vld [vmem:[%s1 + $0x338] sm:$0xf]
      %v385 = vld [vmem:[%s1 + $0x33c] sm:$0xf]
      %v386 = vld [vmem:[%s1 + $0x340] sm:$0xf]
      %v387 = vld [vmem:[%s1 + $0x344] sm:$0xf]
      %v388 = vld [vmem:[%s1 + $0x348] sm:$0xf]
      %v389 = vld [vmem:[%s1 + $0x34c] sm:$0xf]
      %v390 = vld [vmem:[%s1 + $0x350] sm:$0xf]
      %v391 = vld [vmem:[%s1 + $0x354] sm:$0xf]
      %v392 = vld [vmem:[%s1 + $0x358] sm:$0xf]
      %v393 = vld [vmem:[%s1 + $0x35c] sm:$0xf]
      %v394 = vld [vmem:[%s1 + $0x360] sm:$0xf]
      %v395 = vld [vmem:[%s1 + $0x364] sm:$0xf]
      %v396 = vld [vmem:[%s1 + $0x368] sm:$0xf]
      %v397 = vld [vmem:[%s1 + $0x36c] sm:$0xf]
      %v398 = vld [vmem:[%s1 + $0x370] sm:$0xf]
      %v399 = vld [vmem:[%s1 + $0x374] sm:$0xf]
      %v400 = vld [vmem:[%s1 + $0x378] sm:$0xf]
      %v401 = vld [vmem:[%s1 + $0x37c] sm:$0xf]
      %v402 = vld [vmem:[%s1 + $0x380] sm:$0xf]
      %v403 = vld [vmem:[%s1 + $0x384] sm:$0xf]
      %v404 = vld [vmem:[%s1 + $0x388] sm:$0xf]
      %v405 = vld [vmem:[%s1 + $0x38c] sm:$0xf]
      %v406 = vld [vmem:[%s1 + $0x390] sm:$0xf]
      %v407 = vld [vmem:[%s1 + $0x394] sm:$0xf]
      %v408 = vld [vmem:[%s1 + $0x398] sm:$0xf]
      %v409 = vld [vmem:[%s1 + $0x39c] sm:$0xf]
      %v410 = vld [vmem:[%s1 + $0x3a0] sm:$0xf]
      %v411 = vld [vmem:[%s1 + $0x3a4] sm:$0xf]
      %v412 = vld [vmem:[%s1 + $0x3a8] sm:$0xf]
      %v413 = vld [vmem:[%s1 + $0x3ac] sm:$0xf]
      %v414 = vld [vmem:[%s1 + $0x3b0] sm:$0xf]
      %v415 = vld [vmem:[%s1 + $0x3b4] sm:$0xf]
      %v416 = vld [vmem:[%s1 + $0x3b8] sm:$0xf]
      %v417 = vld [vmem:[%s1 + $0x3bc] sm:$0xf]
      %v418 = vld [vmem:[%s1 + $0x3c0] sm:$0xf]
      %v419 = vld [vmem:[%s1 + $0x3c4] sm:$0xf]
      %v420 = vld [vmem:[%s1 + $0x3c8] sm:$0xf]
      %v421 = vld [vmem:[%s1 + $0x3cc] sm:$0xf]
      %v422 = vld [vmem:[%s1 + $0x3d0] sm:$0xf]
      %v423 = vld [vmem:[%s1 + $0x3d4] sm:$0xf]
      %v424 = vld [vmem:[%s1 + $0x3d8] sm:$0xf]
      %v425 = vld [vmem:[%s1 + $0x3dc] sm:$0xf]
      %v426 = vld [vmem:[%s1 + $0x3e0] sm:$0xf]
      %v427 = vld [vmem:[%s1 + $0x3e4] sm:$0xf]
      %v428 = vld [vmem:[%s1 + $0x3e8] sm:$0xf]
      %v429 = vld [vmem:[%s1 + $0x3ec] sm:$0xf]
      %v430 = vld [vmem:[%s1 + $0x3f0] sm:$0xf]
      %v431 = vld [vmem:[%s1 + $0x3f4] sm:$0xf]
      %v432 = vld [vmem:[%s1 + $0x3f8] sm:$0xf]
      %v433 = vld [vmem:[%s1 + $0x3fc] sm:$0xf]
      %v434 = vld [vmem:[%s1 + $0x400] sm:$0xf]
      %v435 = vld [vmem:[%s1 + $0x404] sm:$0xf]
      %v436 = vld [vmem:[%s1 + $0x408] sm:$0xf]
      %v437 = vld [vmem:[%s1 + $0x40c] sm:$0xf]
      %v438 = vld [vmem:[%s1 + $0x410] sm:$0xf]
      %v439 = vld [vmem:[%s1 + $0x414] sm:$0xf]
      %v440 = vld [vmem:[%s1 + $0x418] sm:$0xf]
      %v441 = vld [vmem:[%s1 + $0x41c] sm:$0xf]
      %v442 = vld [vmem:[%s1 + $0x420] sm:$0xf]
      %v443 = vld [vmem:[%s1 + $0x424] sm:$0xf]
      %v444 = vld [vmem:[%s1 + $0x428] sm:$0xf]
      %v445 = vld [vmem:[%s1 + $0x42c] sm:$0xf]
      %v446 = vld [vmem:[%s1 + $0x430] sm:$0xf]
      %v447 = vld [vmem:[%s1 + $0x434] sm:$0xf]
      %v448 = vld [vmem:[%s1 + $0x438] sm:$0xf]
      %v449 = vld [vmem:[%s1 + $0x43c] sm:$0xf]
      %v450 = vld [vmem:[%s1 + $0x440] sm:$0xf]
      %v451 = vld [vmem:[%s1 + $0x444] sm:$0xf]
      %v452 = vld [vmem:[%s1 + $0x448] sm:$0xf]
      %v453 = vld [vmem:[%s1 + $0x44c] sm:$0xf]
      %v454 = vld [vmem:[%s1 + $0x450] sm:$0xf]
      %v455 = vld [vmem:[%s1 + $0x454] sm:$0xf]
      %v456 = vld [vmem:[%s1 + $0x458] sm:$0xf]
      %v457 = vld [vmem:[%s1 + $0x45c] sm:$0xf]
      %v458 = vld [vmem:[%s1 + $0x460] sm:$0xf]
      %v459 = vld [vmem:[%s1 + $0x464] sm:$0xf]
      %v460 = vld [vmem:[%s1 + $0x468] sm:$0xf]
      %v461 = vld [vmem:[%s1 + $0x46c] sm:$0xf]
      %v462 = vld [vmem:[%s1 + $0x470] sm:$0xf]
      %v463 = vld [vmem:[%s1 + $0x474] sm:$0xf]
      %v464 = vld [vmem:[%s1 + $0x478] sm:$0xf]
      %v465 = vld [vmem:[%s1 + $0x47c] sm:$0xf]
      %v466 = vld [vmem:[%s1 + $0x480] sm:$0xf]
      %v467 = vld [vmem:[%s1 + $0x484] sm:$0xf]
      %v468 = vld [vmem:[%s1 + $0x488] sm:$0xf]
      %v469 = vld [vmem:[%s1 + $0x48c] sm:$0xf]
      %v470 = vld [vmem:[%s1 + $0x490] sm:$0xf]
      %v471 = vld [vmem:[%s1 + $0x494] sm:$0xf]
      %v472 = vld [vmem:[%s1 + $0x498] sm:$0xf]
      %v473 = vld [vmem:[%s1 + $0x49c] sm:$0xf]
      %v474 = vld [vmem:[%s1 + $0x4a0] sm:$0xf]
      %v475 = vld [vmem:[%s1 + $0x4a4] sm:$0xf]
      %v476 = vld [vmem:[%s1 + $0x4a8] sm:$0xf]
      %v477 = vld [vmem:[%s1 + $0x4ac] sm:$0xf]
      %v478 = vld [vmem:[%s1 + $0x4b0] sm:$0xf]
      %v479 = vld [vmem:[%s1 + $0x4b4] sm:$0xf]
      %v480 = vld [vmem:[%s1 + $0x4b8] sm:$0xf]
      %v481 = vld [vmem:[%s1 + $0x4bc] sm:$0xf]
      %v482 = vld [vmem:[%s1 + $0x4c0] sm:$0xf]
      %v483 = vld [vmem:[%s1 + $0x4c4] sm:$0xf]
      %v484 = vld [vmem:[%s1 + $0x4c8] sm:$0x1]
      %v495 = vunpack.c.l.b16 %v168
      %v496 = vunpack.c.h.b16 %v168
      %v497 = vunpack.c.l.b16 %v169
      %v498 = vunpack.c.h.b16 %v169
      %v499 = vunpack.c.l.b16 %v170
      %v500 = vunpack.c.h.b16 %v170
      %v501 = vunpack.c.l.b16 %v171
      %v502 = vunpack.c.h.b16 %v171
      %v503 = vunpack.c.l.b16 %v172
      %v504 = vunpack.c.h.b16 %v172
      %v505 = vunpack.c.l.b16 %v173
      %v506 = vunpack.c.h.b16 %v173
      %v507 = vunpack.c.l.b16 %v174
      %v508 = vunpack.c.h.b16 %v174
      %v509 = vunpack.c.l.b16 %v175
      %v510 = vunpack.c.h.b16 %v175
      %v511 = vunpack.c.l.b16 %v176
      %v512 = vunpack.c.h.b16 %v176
      %v513 = vunpack.c.l.b16 %v177
      %v514 = vunpack.c.h.b16 %v177
      %v515 = vpack.c.b16 %v495, %v495
      %v516 = vpack.c.b16 %v496, %v496
      %v517 = vpack.c.b16 %v497, %v497
      %v518 = vpack.c.b16 %v498, %v498
      %v519 = vpack.c.b16 %v499, %v499
      %v520 = vpack.c.b16 %v500, %v500
      %v521 = vpack.c.b16 %v501, %v501
      %v522 = vpack.c.b16 %v502, %v502
      %v523 = vpack.c.b16 %v503, %v503
      %v524 = vpack.c.b16 %v504, %v504
      %v525 = vpack.c.b16 %v505, %v505
      %v526 = vpack.c.b16 %v506, %v506
      %v527 = vpack.c.b16 %v507, %v507
      %v528 = vpack.c.b16 %v508, %v508
      %v529 = vpack.c.b16 %v509, %v509
      %v530 = vpack.c.b16 %v510, %v510
      %v531 = vpack.c.b16 %v511, %v511
      %v532 = vpack.c.b16 %v512, %v512
      %v533 = vpack.c.b16 %v513, %v513
      %v534 = vpack.c.b16 %v514, %v514
      %v861 = vunpack.c.l.b16 %v178
      %v862 = vunpack.c.l.b16 %v179
      %v863 = vunpack.c.l.b16 %v180
      %v864 = vunpack.c.l.b16 %v181
      %v865 = vunpack.c.l.b16 %v182
      %v866 = vunpack.c.l.b16 %v183
      %v867 = vunpack.c.l.b16 %v184
      %v868 = vunpack.c.l.b16 %v185
      %v869 = vunpack.c.l.b16 %v186
      %v870 = vunpack.c.l.b16 %v187
      %v871 = vunpack.c.l.b16 %v188
      %v872 = vunpack.c.l.b16 %v189
      %v873 = vunpack.c.l.b16 %v190
      %v874 = vunpack.c.l.b16 %v191
      %v875 = vunpack.c.l.b16 %v192
      %v876 = vunpack.c.l.b16 %v193
      %v877 = vunpack.c.l.b16 %v194
      %v878 = vunpack.c.l.b16 %v195
      %v879 = vunpack.c.l.b16 %v196
      %v880 = vunpack.c.l.b16 %v197
      %v881 = vunpack.c.l.b16 %v198
      %v882 = vunpack.c.l.b16 %v199
      %v883 = vunpack.c.l.b16 %v200
      %v884 = vunpack.c.l.b16 %v201
      %v885 = vunpack.c.l.b16 %v202
      %v886 = vunpack.c.l.b16 %v203
      %v887 = vunpack.c.l.b16 %v204
      %v888 = vunpack.c.l.b16 %v205
      %v889 = vunpack.c.l.b16 %v206
      %v890 = vunpack.c.l.b16 %v207
      %v891 = vunpack.c.l.b16 %v208
      %v892 = vunpack.c.l.b16 %v209
      %v893 = vunpack.c.l.b16 %v210
      %v894 = vunpack.c.l.b16 %v211
      %v895 = vunpack.c.l.b16 %v212
      %v896 = vunpack.c.l.b16 %v213
      %v897 = vunpack.c.l.b16 %v214
      %v898 = vunpack.c.l.b16 %v215
      %v899 = vunpack.c.l.b16 %v216
      %v900 = vunpack.c.l.b16 %v217
      %v901 = vunpack.c.l.b16 %v218
      %v902 = vunpack.c.l.b16 %v219
      %v903 = vunpack.c.l.b16 %v220
      %v904 = vunpack.c.l.b16 %v221
      %v905 = vunpack.c.l.b16 %v222
      %v906 = vunpack.c.l.b16 %v223
      %v907 = vunpack.c.l.b16 %v224
      %v908 = vunpack.c.l.b16 %v225
      %v909 = vunpack.c.l.b16 %v226
      %v910 = vunpack.c.l.b16 %v227
      %v911 = vunpack.c.l.b16 %v228
      %v912 = vunpack.c.l.b16 %v229
      %v913 = vunpack.c.l.b16 %v230
      %v914 = vunpack.c.l.b16 %v231
      %v915 = vunpack.c.l.b16 %v232
      %v916 = vunpack.c.l.b16 %v233
      %v917 = vunpack.c.l.b16 %v234
      %v918 = vunpack.c.l.b16 %v235
      %v919 = vunpack.c.l.b16 %v236
      %v920 = vunpack.c.l.b16 %v237
      %v921 = vunpack.c.l.b16 %v238
      %v922 = vunpack.c.l.b16 %v239
      %v923 = vunpack.c.l.b16 %v240
      %v924 = vunpack.c.l.b16 %v241
      %v925 = vunpack.c.l.b16 %v242
      %v926 = vunpack.c.l.b16 %v243
      %v927 = vunpack.c.l.b16 %v244
      %v928 = vunpack.c.l.b16 %v245
      %v929 = vunpack.c.l.b16 %v246
      %v930 = vunpack.c.l.b16 %v247
      %v931 = vunpack.c.l.b16 %v248
      %v932 = vunpack.c.l.b16 %v249
      %v933 = vunpack.c.l.b16 %v250
      %v934 = vunpack.c.l.b16 %v251
      %v935 = vunpack.c.l.b16 %v252
      %v936 = vunpack.c.l.b16 %v253
      %v937 = vunpack.c.l.b16 %v254
      %v938 = vunpack.c.l.b16 %v255
      %v939 = vunpack.c.l.b16 %v256
      %v940 = vunpack.c.l.b16 %v257
      %v941 = vunpack.c.l.b16 %v258
      %v942 = vunpack.c.l.b16 %v259
      %v943 = vunpack.c.l.b16 %v260
      %v944 = vunpack.c.l.b16 %v261
      %v945 = vunpack.c.l.b16 %v262
      %v946 = vunpack.c.l.b16 %v263
      %v947 = vunpack.c.l.b16 %v264
      %v948 = vunpack.c.l.b16 %v265
      %v949 = vunpack.c.l.b16 %v266
      %v950 = vunpack.c.l.b16 %v267
      %v951 = vunpack.c.l.b16 %v268
      %v952 = vunpack.c.l.b16 %v269
      %v953 = vunpack.c.l.b16 %v270
      %v954 = vunpack.c.l.b16 %v271
      %v955 = vunpack.c.l.b16 %v272
      %v956 = vunpack.c.l.b16 %v273
      %v957 = vunpack.c.l.b16 %v274
      %v958 = vunpack.c.l.b16 %v275
      %v959 = vunpack.c.l.b16 %v276
      %v960 = vunpack.c.l.b16 %v277
      %v961 = vunpack.c.l.b16 %v278
      %v962 = vunpack.c.l.b16 %v279
      %v963 = vunpack.c.l.b16 %v280
      %v964 = vunpack.c.l.b16 %v281
      %v965 = vunpack.c.l.b16 %v282
      %v966 = vunpack.c.l.b16 %v283
      %v967 = vunpack.c.l.b16 %v284
      %v968 = vunpack.c.l.b16 %v285
      %v969 = vunpack.c.l.b16 %v286
      %v970 = vunpack.c.l.b16 %v287
      %v971 = vunpack.c.l.b16 %v288
      %v972 = vunpack.c.l.b16 %v289
      %v973 = vunpack.c.l.b16 %v290
      %v974 = vunpack.c.l.b16 %v291
      %v975 = vunpack.c.l.b16 %v292
      %v976 = vunpack.c.l.b16 %v293
      %v977 = vunpack.c.l.b16 %v294
      %v978 = vunpack.c.l.b16 %v295
      %v979 = vunpack.c.l.b16 %v296
      %v980 = vunpack.c.l.b16 %v297
      %v981 = vunpack.c.l.b16 %v298
      %v982 = vunpack.c.l.b16 %v299
      %v983 = vunpack.c.l.b16 %v300
      %v984 = vunpack.c.l.b16 %v301
      %v985 = vunpack.c.l.b16 %v302
      %v986 = vunpack.c.l.b16 %v303
      %v987 = vunpack.c.l.b16 %v304
      %v988 = vunpack.c.l.b16 %v305
      %v989 = vunpack.c.l.b16 %v306
      %v990 = vunpack.c.l.b16 %v307
      %v991 = vunpack.c.l.b16 %v308
      %v992 = vunpack.c.l.b16 %v309
      %v993 = vunpack.c.l.b16 %v310
      %v994 = vunpack.c.l.b16 %v311
      %v995 = vunpack.c.l.b16 %v312
      %v996 = vunpack.c.l.b16 %v313
      %v997 = vunpack.c.l.b16 %v314
      %v998 = vunpack.c.l.b16 %v315
      %v999 = vunpack.c.l.b16 %v316
      %v1000 = vunpack.c.l.b16 %v317
      %v1001 = vunpack.c.l.b16 %v318
      %v1002 = vunpack.c.l.b16 %v319
      %v1003 = vunpack.c.l.b16 %v320
      %v1004 = vunpack.c.l.b16 %v321
      %v1005 = vunpack.c.l.b16 %v322
      %v1006 = vunpack.c.l.b16 %v323
      %v1007 = vunpack.c.l.b16 %v324
      %v1008 = vunpack.c.l.b16 %v325
      %v1009 = vunpack.c.l.b16 %v326
      %v1010 = vunpack.c.l.b16 %v327
      %v1011 = vunpack.c.l.b16 %v328
      %v1012 = vunpack.c.l.b16 %v329
      %v1013 = vunpack.c.l.b16 %v330
      %v1014 = vunpack.c.l.b16 %v331
      %v1015 = vunpack.c.l.b16 %v332
      %v1016 = vunpack.c.l.b16 %v333
      %v1017 = vunpack.c.l.b16 %v334
      %v1018 = vunpack.c.l.b16 %v335
      %v1019 = vunpack.c.l.b16 %v336
      %v1020 = vunpack.c.l.b16 %v337
      %v1021 = vunpack.c.l.b16 %v338
      %v1022 = vunpack.c.l.b16 %v339
      %v1023 = vunpack.c.l.b16 %v340
      %v1024 = vunpack.c.l.b16 %v341
      %v1025 = vunpack.c.l.b16 %v342
      %v1026 = vunpack.c.l.b16 %v343
      %v1027 = vunpack.c.l.b16 %v344
      %v1028 = vunpack.c.l.b16 %v345
      %v1029 = vunpack.c.l.b16 %v346
      %v1030 = vunpack.c.l.b16 %v347
      %v1031 = vunpack.c.l.b16 %v348
      %v1032 = vunpack.c.l.b16 %v349
      %v1033 = vunpack.c.l.b16 %v350
      %v1034 = vunpack.c.l.b16 %v351
      %v1035 = vunpack.c.l.b16 %v352
      %v1036 = vunpack.c.l.b16 %v353
      %v1037 = vunpack.c.l.b16 %v354
      %v1038 = vunpack.c.l.b16 %v355
      %v1039 = vunpack.c.l.b16 %v356
      %v1040 = vunpack.c.l.b16 %v357
      %v1041 = vunpack.c.l.b16 %v358
      %v1042 = vunpack.c.l.b16 %v359
      %v1043 = vunpack.c.l.b16 %v360
      %v1044 = vunpack.c.l.b16 %v361
      %v1045 = vunpack.c.l.b16 %v362
      %v1046 = vunpack.c.l.b16 %v363
      %v1047 = vunpack.c.l.b16 %v364
      %v1048 = vunpack.c.l.b16 %v365
      %v1049 = vunpack.c.l.b16 %v366
      %v1050 = vunpack.c.l.b16 %v367
      %v1051 = vunpack.c.l.b16 %v368
      %v1052 = vunpack.c.l.b16 %v369
      %v1053 = vunpack.c.l.b16 %v370
      %v1054 = vunpack.c.l.b16 %v371
      %v1055 = vunpack.c.l.b16 %v372
      %v1056 = vunpack.c.l.b16 %v373
      %v1057 = vunpack.c.l.b16 %v374
      %v1058 = vunpack.c.l.b16 %v375
      %v1059 = vunpack.c.l.b16 %v376
      %v1060 = vunpack.c.l.b16 %v377
      %v1061 = vunpack.c.l.b16 %v378
      %v1062 = vunpack.c.l.b16 %v379
      %v1063 = vunpack.c.l.b16 %v380
      %v1064 = vunpack.c.l.b16 %v381
      %v1065 = vunpack.c.l.b16 %v382
      %v1066 = vunpack.c.l.b16 %v383
      %v1067 = vunpack.c.l.b16 %v384
      %v1068 = vunpack.c.l.b16 %v385
      %v1069 = vunpack.c.l.b16 %v386
      %v1070 = vunpack.c.l.b16 %v387
      %v1071 = vunpack.c.l.b16 %v388
      %v1072 = vunpack.c.l.b16 %v389
      %v1073 = vunpack.c.l.b16 %v390
      %v1074 = vunpack.c.l.b16 %v391
      %v1075 = vunpack.c.l.b16 %v392
      %v1076 = vunpack.c.l.b16 %v393
      %v1077 = vunpack.c.l.b16 %v394
      %v1078 = vunpack.c.l.b16 %v395
      %v1079 = vunpack.c.l.b16 %v396
      %v1080 = vunpack.c.l.b16 %v397
      %v1081 = vunpack.c.l.b16 %v398
      %v1082 = vunpack.c.l.b16 %v399
      %v1083 = vunpack.c.l.b16 %v400
      %v1084 = vunpack.c.l.b16 %v401
      %v1085 = vunpack.c.l.b16 %v402
      %v1086 = vunpack.c.l.b16 %v403
      %v1087 = vunpack.c.l.b16 %v404
      %v1088 = vunpack.c.l.b16 %v405
      %v1089 = vunpack.c.l.b16 %v406
      %v1090 = vunpack.c.l.b16 %v407
      %v1091 = vunpack.c.l.b16 %v408
      %v1092 = vunpack.c.l.b16 %v409
      %v1093 = vunpack.c.l.b16 %v410
      %v1094 = vunpack.c.l.b16 %v411
      %v1095 = vunpack.c.l.b16 %v412
      %v1096 = vunpack.c.l.b16 %v413
      %v1097 = vunpack.c.l.b16 %v414
      %v1098 = vunpack.c.l.b16 %v415
      %v1099 = vunpack.c.l.b16 %v416
      %v1100 = vunpack.c.l.b16 %v417
      %v1101 = vunpack.c.l.b16 %v418
      %v1102 = vunpack.c.l.b16 %v419
      %v1103 = vunpack.c.l.b16 %v420
      %v1104 = vunpack.c.l.b16 %v421
      %v1105 = vunpack.c.l.b16 %v422
      %v1106 = vunpack.c.l.b16 %v423
      %v1107 = vunpack.c.l.b16 %v424
      %v1108 = vunpack.c.l.b16 %v425
      %v1109 = vunpack.c.l.b16 %v426
      %v1110 = vunpack.c.l.b16 %v427
      %v1111 = vunpack.c.l.b16 %v428
      %v1112 = vunpack.c.l.b16 %v429
      %v1113 = vunpack.c.l.b16 %v430
      %v1114 = vunpack.c.l.b16 %v431
      %v1115 = vunpack.c.l.b16 %v432
      %v1116 = vunpack.c.l.b16 %v433
      %v1117 = vunpack.c.l.b16 %v434
      %v1118 = vunpack.c.l.b16 %v435
      %v1119 = vunpack.c.l.b16 %v436
      %v1120 = vunpack.c.l.b16 %v437
      %v1121 = vunpack.c.l.b16 %v438
      %v1122 = vunpack.c.l.b16 %v439
      %v1123 = vunpack.c.l.b16 %v440
      %v1124 = vunpack.c.l.b16 %v441
      %v1125 = vunpack.c.l.b16 %v442
      %v1126 = vunpack.c.l.b16 %v443
      %v1127 = vunpack.c.l.b16 %v444
      %v1128 = vunpack.c.l.b16 %v445
      %v1129 = vunpack.c.l.b16 %v446
      %v1130 = vunpack.c.l.b16 %v447
      %v1131 = vunpack.c.l.b16 %v448
      %v1132 = vunpack.c.l.b16 %v449
      %v1133 = vunpack.c.l.b16 %v450
      %v1134 = vunpack.c.l.b16 %v451
      %v1135 = vunpack.c.l.b16 %v452
      %v1136 = vunpack.c.l.b16 %v453
      %v1137 = vunpack.c.l.b16 %v454
      %v1138 = vunpack.c.l.b16 %v455
      %v1139 = vunpack.c.l.b16 %v456
      %v1140 = vunpack.c.l.b16 %v457
      %v1141 = vunpack.c.l.b16 %v458
      %v1142 = vunpack.c.l.b16 %v459
      %v1143 = vunpack.c.l.b16 %v460
      %v1144 = vunpack.c.l.b16 %v461
      %v1145 = vunpack.c.l.b16 %v462
      %v1146 = vunpack.c.l.b16 %v463
      %v1147 = vunpack.c.l.b16 %v464
      %v1148 = vunpack.c.l.b16 %v465
      %v1149 = vunpack.c.l.b16 %v466
      %v1150 = vunpack.c.l.b16 %v467
      %v1151 = vunpack.c.l.b16 %v468
      %v1152 = vunpack.c.l.b16 %v469
      %v1153 = vunpack.c.l.b16 %v470
      %v1154 = vunpack.c.l.b16 %v471
      %v1155 = vunpack.c.l.b16 %v472
      %v1156 = vunpack.c.l.b16 %v473
      %v1157 = vunpack.c.l.b16 %v474
      %v1158 = vunpack.c.l.b16 %v475
      %v1159 = vunpack.c.l.b16 %v476
      %v1160 = vunpack.c.l.b16 %v477
      %v1161 = vunpack.c.l.b16 %v478
      %v1162 = vunpack.c.l.b16 %v479
      %v1163 = vunpack.c.l.b16 %v480
      %v1164 = vunpack.c.l.b16 %v481
      %v1165 = vunpack.c.l.b16 %v482
      %v1166 = vunpack.c.l.b16 %v483
      %v1167 = vunpack.c.l.b16 %v484
      %v1168 = vpack.c.b16 %v862, %v861
      %v1169 = vpack.c.b16 %v864, %v863
      %v1170 = vpack.c.b16 %v866, %v865
      %v1171 = vpack.c.b16 %v868, %v867
      %v1172 = vpack.c.b16 %v870, %v869
      %v1173 = vpack.c.b16 %v872, %v871
      %v1174 = vpack.c.b16 %v874, %v873
      %v1175 = vpack.c.b16 %v876, %v875
      %v1176 = vpack.c.b16 %v878, %v877
      %v1177 = vpack.c.b16 %v880, %v879
      %v1178 = vpack.c.b16 %v882, %v881
      %v1179 = vpack.c.b16 %v884, %v883
      %v1180 = vpack.c.b16 %v886, %v885
      %v1181 = vpack.c.b16 %v888, %v887
      %v1182 = vpack.c.b16 %v890, %v889
      %v1183 = vpack.c.b16 %v892, %v891
      %v1184 = vpack.c.b16 %v894, %v893
      %v1185 = vpack.c.b16 %v896, %v895
      %v1186 = vpack.c.b16 %v898, %v897
      %v1187 = vpack.c.b16 %v900, %v899
      %v1188 = vpack.c.b16 %v902, %v901
      %v1189 = vpack.c.b16 %v904, %v903
      %v1190 = vpack.c.b16 %v906, %v905
      %v1191 = vpack.c.b16 %v908, %v907
      %v1192 = vpack.c.b16 %v910, %v909
      %v1193 = vpack.c.b16 %v912, %v911
      %v1194 = vpack.c.b16 %v914, %v913
      %v1195 = vpack.c.b16 %v916, %v915
      %v1196 = vpack.c.b16 %v918, %v917
      %v1197 = vpack.c.b16 %v920, %v919
      %v1198 = vpack.c.b16 %v922, %v921
      %v1199 = vpack.c.b16 %v924, %v923
      %v1200 = vpack.c.b16 %v926, %v925
      %v1201 = vpack.c.b16 %v928, %v927
      %v1202 = vpack.c.b16 %v930, %v929
      %v1203 = vpack.c.b16 %v932, %v931
      %v1204 = vpack.c.b16 %v934, %v933
      %v1205 = vpack.c.b16 %v936, %v935
      %v1206 = vpack.c.b16 %v938, %v937
      %v1207 = vpack.c.b16 %v940, %v939
      %v1208 = vpack.c.b16 %v942, %v941
      %v1209 = vpack.c.b16 %v944, %v943
      %v1210 = vpack.c.b16 %v946, %v945
      %v1211 = vpack.c.b16 %v948, %v947
      %v1212 = vpack.c.b16 %v950, %v949
      %v1213 = vpack.c.b16 %v952, %v951
      %v1214 = vpack.c.b16 %v954, %v953
      %v1215 = vpack.c.b16 %v956, %v955
      %v1216 = vpack.c.b16 %v958, %v957
      %v1217 = vpack.c.b16 %v960, %v959
      %v1218 = vpack.c.b16 %v962, %v961
      %v1219 = vpack.c.b16 %v964, %v963
      %v1220 = vpack.c.b16 %v966, %v965
      %v1221 = vpack.c.b16 %v968, %v967
      %v1222 = vpack.c.b16 %v970, %v969
      %v1223 = vpack.c.b16 %v972, %v971
      %v1224 = vpack.c.b16 %v974, %v973
      %v1225 = vpack.c.b16 %v976, %v975
      %v1226 = vpack.c.b16 %v978, %v977
      %v1227 = vpack.c.b16 %v980, %v979
      %v1228 = vpack.c.b16 %v982, %v981
      %v1229 = vpack.c.b16 %v984, %v983
      %v1230 = vpack.c.b16 %v986, %v985
      %v1231 = vpack.c.b16 %v988, %v987
      %v1232 = vpack.c.b16 %v990, %v989
      %v1233 = vpack.c.b16 %v992, %v991
      %v1234 = vpack.c.b16 %v994, %v993
      %v1235 = vpack.c.b16 %v996, %v995
      %v1236 = vpack.c.b16 %v998, %v997
      %v1237 = vpack.c.b16 %v1000, %v999
      %v1238 = vpack.c.b16 %v1002, %v1001
      %v1239 = vpack.c.b16 %v1004, %v1003
      %v1240 = vpack.c.b16 %v1006, %v1005
      %v1241 = vpack.c.b16 %v1008, %v1007
      %v1242 = vpack.c.b16 %v1010, %v1009
      %v1243 = vpack.c.b16 %v1012, %v1011
      %v1244 = vpack.c.b16 %v1014, %v1013
      %v1245 = vpack.c.b16 %v1016, %v1015
      %v1246 = vpack.c.b16 %v1018, %v1017
      %v1247 = vpack.c.b16 %v1020, %v1019
      %v1248 = vpack.c.b16 %v1022, %v1021
      %v1249 = vpack.c.b16 %v1024, %v1023
      %v1250 = vpack.c.b16 %v1026, %v1025
      %v1251 = vpack.c.b16 %v1028, %v1027
      %v1252 = vpack.c.b16 %v1030, %v1029
      %v1253 = vpack.c.b16 %v1032, %v1031
      %v1254 = vpack.c.b16 %v1034, %v1033
      %v1255 = vpack.c.b16 %v1036, %v1035
      %v1256 = vpack.c.b16 %v1038, %v1037
      %v1257 = vpack.c.b16 %v1040, %v1039
      %v1258 = vpack.c.b16 %v1042, %v1041
      %v1259 = vpack.c.b16 %v1044, %v1043
      %v1260 = vpack.c.b16 %v1046, %v1045
      %v1261 = vpack.c.b16 %v1048, %v1047
      %v1262 = vpack.c.b16 %v1050, %v1049
      %v1263 = vpack.c.b16 %v1052, %v1051
      %v1264 = vpack.c.b16 %v1054, %v1053
      %v1265 = vpack.c.b16 %v1056, %v1055
      %v1266 = vpack.c.b16 %v1058, %v1057
      %v1267 = vpack.c.b16 %v1060, %v1059
      %v1268 = vpack.c.b16 %v1062, %v1061
      %v1269 = vpack.c.b16 %v1064, %v1063
      %v1270 = vpack.c.b16 %v1066, %v1065
      %v1271 = vpack.c.b16 %v1068, %v1067
      %v1272 = vpack.c.b16 %v1070, %v1069
      %v1273 = vpack.c.b16 %v1072, %v1071
      %v1274 = vpack.c.b16 %v1074, %v1073
      %v1275 = vpack.c.b16 %v1076, %v1075
      %v1276 = vpack.c.b16 %v1078, %v1077
      %v1277 = vpack.c.b16 %v1080, %v1079
      %v1278 = vpack.c.b16 %v1082, %v1081
      %v1279 = vpack.c.b16 %v1084, %v1083
      %v1280 = vpack.c.b16 %v1086, %v1085
      %v1281 = vpack.c.b16 %v1088, %v1087
      %v1282 = vpack.c.b16 %v1090, %v1089
      %v1283 = vpack.c.b16 %v1092, %v1091
      %v1284 = vpack.c.b16 %v1094, %v1093
      %v1285 = vpack.c.b16 %v1096, %v1095
      %v1286 = vpack.c.b16 %v1098, %v1097
      %v1287 = vpack.c.b16 %v1100, %v1099
      %v1288 = vpack.c.b16 %v1102, %v1101
      %v1289 = vpack.c.b16 %v1104, %v1103
      %v1290 = vpack.c.b16 %v1106, %v1105
      %v1291 = vpack.c.b16 %v1108, %v1107
      %v1292 = vpack.c.b16 %v1110, %v1109
      %v1293 = vpack.c.b16 %v1112, %v1111
      %v1294 = vpack.c.b16 %v1114, %v1113
      %v1295 = vpack.c.b16 %v1116, %v1115
      %v1296 = vpack.c.b16 %v1118, %v1117
      %v1297 = vpack.c.b16 %v1120, %v1119
      %v1298 = vpack.c.b16 %v1122, %v1121
      %v1299 = vpack.c.b16 %v1124, %v1123
      %v1300 = vpack.c.b16 %v1126, %v1125
      %v1301 = vpack.c.b16 %v1128, %v1127
      %v1302 = vpack.c.b16 %v1130, %v1129
      %v1303 = vpack.c.b16 %v1132, %v1131
      %v1304 = vpack.c.b16 %v1134, %v1133
      %v1305 = vpack.c.b16 %v1136, %v1135
      %v1306 = vpack.c.b16 %v1138, %v1137
      %v1307 = vpack.c.b16 %v1140, %v1139
      %v1308 = vpack.c.b16 %v1142, %v1141
      %v1309 = vpack.c.b16 %v1144, %v1143
      %v1310 = vpack.c.b16 %v1146, %v1145
      %v1311 = vpack.c.b16 %v1148, %v1147
      %v1312 = vpack.c.b16 %v1150, %v1149
      %v1313 = vpack.c.b16 %v1152, %v1151
      %v1314 = vpack.c.b16 %v1154, %v1153
      %v1315 = vpack.c.b16 %v1156, %v1155
      %v1316 = vpack.c.b16 %v1158, %v1157
      %v1317 = vpack.c.b16 %v1160, %v1159
      %v1318 = vpack.c.b16 %v1162, %v1161
      %v1319 = vpack.c.b16 %v1164, %v1163
      %v1320 = vpack.c.b16 %v1166, %v1165
      %v1321 = vpack.c.b16 %v1167, %v1167
      %vm1475 = vcmask 146432
      %v1477 = vsel %vm1475, %v534, 0
      %vm1479 = vcmask 1040384
      %v1481 = vsel %vm1479, %v1321, 0
      %1483 = vmatprep.subr.bf16.mxu0 0
      %1484 = vmatpush1.bf16.msra.mxu0 %v1175
      %1485 = vmatprep.subr.bf16.mxu0 0
      %1486 = vmatpush1.bf16.msra.mxu0 %v1174
      %1487 = vmatprep.subr.bf16.mxu0 0
      %1488 = vmatpush1.bf16.msra.mxu0 %v1173
      %1489 = vmatprep.subr.bf16.mxu0 0
      %1490 = vmatpush1.bf16.msra.mxu0 %v1172
      %1491 = vmatprep.subr.bf16.mxu0 0
      %1492 = vmatpush1.bf16.msra.mxu0 %v1171
      %1493 = vmatprep.subr.bf16.mxu0 0
      %1494 = vmatpush1.bf16.msra.mxu0 %v1170
      %1495 = vmatprep.subr.bf16.mxu0 0
      %1496 = vmatpush1.bf16.msra.mxu0 %v1169
      %1497 = vmatprep.subr.bf16.mxu0 0
      %1498 = vmatpush1.bf16.msra.mxu0 %v1168
      %1499 = vmatprep.subr.bf16.mxu0 0
      %1500 = vmatpush2.bf16.msra.mxu0 %v1183
      %1501 = vmatprep.subr.bf16.mxu0 0
      %1502 = vmatpush2.bf16.msra.mxu0 %v1182
      %1503 = vmatprep.subr.bf16.mxu0 0
      %1504 = vmatpush2.bf16.msra.mxu0 %v1181
      %1505 = vmatprep.subr.bf16.mxu0 0
      %1506 = vmatpush2.bf16.msra.mxu0 %v1180
      %1507 = vmatprep.subr.bf16.mxu0 0
      %1508 = vmatpush2.bf16.msra.mxu0 %v1179
      %1509 = vmatprep.subr.bf16.mxu0 0
      %1510 = vmatpush2.bf16.msra.mxu0 %v1178
      %1511 = vmatprep.subr.bf16.mxu0 0
      %1512 = vmatpush2.bf16.msra.mxu0 %v1177
      %1513 = vmatprep.subr.bf16.mxu0 0
      %1514 = vmatpush2.bf16.msra.mxu0 %v1176
      %1515 = vmatprep.mubr.bf16.mxu0 %v516
      %1516 = vmatmul.mubr.bf16.gmra.mxu0 %v515
      %v1517 = vpop.f32.mrf.mxu0
      %v1518 = vadd.f32 0.0, %v1517
      %v1519 = vpop.f32.mrf.mxu0
      %v1520 = vpop.f32.mrf.mxu0
      %v1521 = vpop.f32.mrf.mxu0
      %1522 = vdwg.mxu0
      %1523 = vmatprep.subr.bf16.mxu0 0
      %1524 = vmatpush1.bf16.msra.mxu0 %v1191
      %1525 = vmatprep.subr.bf16.mxu0 0
      %1526 = vmatpush1.bf16.msra.mxu0 %v1190
      %1527 = vmatprep.subr.bf16.mxu0 0
      %1528 = vmatpush1.bf16.msra.mxu0 %v1189
      %1529 = vmatprep.subr.bf16.mxu0 0
      %1530 = vmatpush1.bf16.msra.mxu0 %v1188
      %1531 = vmatprep.subr.bf16.mxu0 0
      %1532 = vmatpush1.bf16.msra.mxu0 %v1187
      %1533 = vmatprep.subr.bf16.mxu0 0
      %1534 = vmatpush1.bf16.msra.mxu0 %v1186
      %1535 = vmatprep.subr.bf16.mxu0 0
      %1536 = vmatpush1.bf16.msra.mxu0 %v1185
      %1537 = vmatprep.subr.bf16.mxu0 0
      %1538 = vmatpush1.bf16.msra.mxu0 %v1184
      %1539 = vmatprep.subr.bf16.mxu0 0
      %1540 = vmatpush2.bf16.msra.mxu0 %v1199
      %1541 = vmatprep.subr.bf16.mxu0 0
      %1542 = vmatpush2.bf16.msra.mxu0 %v1198
      %1543 = vmatprep.subr.bf16.mxu0 0
      %1544 = vmatpush2.bf16.msra.mxu0 %v1197
      %1545 = vmatprep.subr.bf16.mxu0 0
      %1546 = vmatpush2.bf16.msra.mxu0 %v1196
      %1547 = vmatprep.subr.bf16.mxu0 0
      %1548 = vmatpush2.bf16.msra.mxu0 %v1195
      %1549 = vmatprep.subr.bf16.mxu0 0
      %1550 = vmatpush2.bf16.msra.mxu0 %v1194
      %1551 = vmatprep.subr.bf16.mxu0 0
      %1552 = vmatpush2.bf16.msra.mxu0 %v1193
      %1553 = vmatprep.subr.bf16.mxu0 0
      %1554 = vmatpush2.bf16.msra.mxu0 %v1192
      %1555 = vmatprep.mubr.bf16.mxu0 %v518
      %1556 = vmatmul.mubr.bf16.gmra.mxu0 %v517
      %v1557 = vpop.f32.mrf.mxu0
      %v1558 = vadd.f32 %v1518, %v1557
      %v1559 = vpop.f32.mrf.mxu0
      %v1560 = vpop.f32.mrf.mxu0
      %v1561 = vpop.f32.mrf.mxu0
      %1562 = vdwg.mxu0
      %1563 = vmatprep.subr.bf16.mxu0 0
      %1564 = vmatpush1.bf16.msra.mxu0 %v1207
      %1565 = vmatprep.subr.bf16.mxu0 0
      %1566 = vmatpush1.bf16.msra.mxu0 %v1206
      %1567 = vmatprep.subr.bf16.mxu0 0
      %1568 = vmatpush1.bf16.msra.mxu0 %v1205
      %1569 = vmatprep.subr.bf16.mxu0 0
      %1570 = vmatpush1.bf16.msra.mxu0 %v1204
      %1571 = vmatprep.subr.bf16.mxu0 0
      %1572 = vmatpush1.bf16.msra.mxu0 %v1203
      %1573 = vmatprep.subr.bf16.mxu0 0
      %1574 = vmatpush1.bf16.msra.mxu0 %v1202
      %1575 = vmatprep.subr.bf16.mxu0 0
      %1576 = vmatpush1.bf16.msra.mxu0 %v1201
      %1577 = vmatprep.subr.bf16.mxu0 0
      %1578 = vmatpush1.bf16.msra.mxu0 %v1200
      %1579 = vmatprep.subr.bf16.mxu0 0
      %1580 = vmatpush2.bf16.msra.mxu0 %v1215
      %1581 = vmatprep.subr.bf16.mxu0 0
      %1582 = vmatpush2.bf16.msra.mxu0 %v1214
      %1583 = vmatprep.subr.bf16.mxu0 0
      %1584 = vmatpush2.bf16.msra.mxu0 %v1213
      %1585 = vmatprep.subr.bf16.mxu0 0
      %1586 = vmatpush2.bf16.msra.mxu0 %v1212
      %1587 = vmatprep.subr.bf16.mxu0 0
      %1588 = vmatpush2.bf16.msra.mxu0 %v1211
      %1589 = vmatprep.subr.bf16.mxu0 0
      %1590 = vmatpush2.bf16.msra.mxu0 %v1210
      %1591 = vmatprep.subr.bf16.mxu0 0
      %1592 = vmatpush2.bf16.msra.mxu0 %v1209
      %1593 = vmatprep.subr.bf16.mxu0 0
      %1594 = vmatpush2.bf16.msra.mxu0 %v1208
      %1595 = vmatprep.mubr.bf16.mxu0 %v520
      %1596 = vmatmul.mubr.bf16.gmra.mxu0 %v519
      %v1597 = vpop.f32.mrf.mxu0
      %v1598 = vadd.f32 %v1558, %v1597
      %v1599 = vpop.f32.mrf.mxu0
      %v1600 = vpop.f32.mrf.mxu0
      %v1601 = vpop.f32.mrf.mxu0
      %1602 = vdwg.mxu0
      %1603 = vmatprep.subr.bf16.mxu0 0
      %1604 = vmatpush1.bf16.msra.mxu0 %v1223
      %1605 = vmatprep.subr.bf16.mxu0 0
      %1606 = vmatpush1.bf16.msra.mxu0 %v1222
      %1607 = vmatprep.subr.bf16.mxu0 0
      %1608 = vmatpush1.bf16.msra.mxu0 %v1221
      %1609 = vmatprep.subr.bf16.mxu0 0
      %1610 = vmatpush1.bf16.msra.mxu0 %v1220
      %1611 = vmatprep.subr.bf16.mxu0 0
      %1612 = vmatpush1.bf16.msra.mxu0 %v1219
      %1613 = vmatprep.subr.bf16.mxu0 0
      %1614 = vmatpush1.bf16.msra.mxu0 %v1218
      %1615 = vmatprep.subr.bf16.mxu0 0
      %1616 = vmatpush1.bf16.msra.mxu0 %v1217
      %1617 = vmatprep.subr.bf16.mxu0 0
      %1618 = vmatpush1.bf16.msra.mxu0 %v1216
      %1619 = vmatprep.subr.bf16.mxu0 0
      %1620 = vmatpush2.bf16.msra.mxu0 %v1231
      %1621 = vmatprep.subr.bf16.mxu0 0
      %1622 = vmatpush2.bf16.msra.mxu0 %v1230
      %1623 = vmatprep.subr.bf16.mxu0 0
      %1624 = vmatpush2.bf16.msra.mxu0 %v1229
      %1625 = vmatprep.subr.bf16.mxu0 0
      %1626 = vmatpush2.bf16.msra.mxu0 %v1228
      %1627 = vmatprep.subr.bf16.mxu0 0
      %1628 = vmatpush2.bf16.msra.mxu0 %v1227
      %1629 = vmatprep.subr.bf16.mxu0 0
      %1630 = vmatpush2.bf16.msra.mxu0 %v1226
      %1631 = vmatprep.subr.bf16.mxu0 0
      %1632 = vmatpush2.bf16.msra.mxu0 %v1225
      %1633 = vmatprep.subr.bf16.mxu0 0
      %1634 = vmatpush2.bf16.msra.mxu0 %v1224
      %1635 = vmatprep.mubr.bf16.mxu0 %v522
      %1636 = vmatmul.mubr.bf16.gmra.mxu0 %v521
      %v1637 = vpop.f32.mrf.mxu0
      %v1638 = vadd.f32 %v1598, %v1637
      %v1639 = vpop.f32.mrf.mxu0
      %v1640 = vpop.f32.mrf.mxu0
      %v1641 = vpop.f32.mrf.mxu0
      %1642 = vdwg.mxu0
      %1643 = vmatprep.subr.bf16.mxu0 0
      %1644 = vmatpush1.bf16.msra.mxu0 %v1239
      %1645 = vmatprep.subr.bf16.mxu0 0
      %1646 = vmatpush1.bf16.msra.mxu0 %v1238
      %1647 = vmatprep.subr.bf16.mxu0 0
      %1648 = vmatpush1.bf16.msra.mxu0 %v1237
      %1649 = vmatprep.subr.bf16.mxu0 0
      %1650 = vmatpush1.bf16.msra.mxu0 %v1236
      %1651 = vmatprep.subr.bf16.mxu0 0
      %1652 = vmatpush1.bf16.msra.mxu0 %v1235
      %1653 = vmatprep.subr.bf16.mxu0 0
      %1654 = vmatpush1.bf16.msra.mxu0 %v1234
      %1655 = vmatprep.subr.bf16.mxu0 0
      %1656 = vmatpush1.bf16.msra.mxu0 %v1233
      %1657 = vmatprep.subr.bf16.mxu0 0
      %1658 = vmatpush1.bf16.msra.mxu0 %v1232
      %1659 = vmatprep.subr.bf16.mxu0 0
      %1660 = vmatpush2.bf16.msra.mxu0 %v1247
      %1661 = vmatprep.subr.bf16.mxu0 0
      %1662 = vmatpush2.bf16.msra.mxu0 %v1246
      %1663 = vmatprep.subr.bf16.mxu0 0
      %1664 = vmatpush2.bf16.msra.mxu0 %v1245
      %1665 = vmatprep.subr.bf16.mxu0 0
      %1666 = vmatpush2.bf16.msra.mxu0 %v1244
      %1667 = vmatprep.subr.bf16.mxu0 0
      %1668 = vmatpush2.bf16.msra.mxu0 %v1243
      %1669 = vmatprep.subr.bf16.mxu0 0
      %1670 = vmatpush2.bf16.msra.mxu0 %v1242
      %1671 = vmatprep.subr.bf16.mxu0 0
      %1672 = vmatpush2.bf16.msra.mxu0 %v1241
      %1673 = vmatprep.subr.bf16.mxu0 0
      %1674 = vmatpush2.bf16.msra.mxu0 %v1240
      %1675 = vmatprep.mubr.bf16.mxu0 %v524
      %1676 = vmatmul.mubr.bf16.gmra.mxu0 %v523
      %v1677 = vpop.f32.mrf.mxu0
      %v1678 = vadd.f32 %v1638, %v1677
      %v1679 = vpop.f32.mrf.mxu0
      %v1680 = vpop.f32.mrf.mxu0
      %v1681 = vpop.f32.mrf.mxu0
      %1682 = vdwg.mxu0
      %1683 = vmatprep.subr.bf16.mxu0 0
      %1684 = vmatpush1.bf16.msra.mxu0 %v1255
      %1685 = vmatprep.subr.bf16.mxu0 0
      %1686 = vmatpush1.bf16.msra.mxu0 %v1254
      %1687 = vmatprep.subr.bf16.mxu0 0
      %1688 = vmatpush1.bf16.msra.mxu0 %v1253
      %1689 = vmatprep.subr.bf16.mxu0 0
      %1690 = vmatpush1.bf16.msra.mxu0 %v1252
      %1691 = vmatprep.subr.bf16.mxu0 0
      %1692 = vmatpush1.bf16.msra.mxu0 %v1251
      %1693 = vmatprep.subr.bf16.mxu0 0
      %1694 = vmatpush1.bf16.msra.mxu0 %v1250
      %1695 = vmatprep.subr.bf16.mxu0 0
      %1696 = vmatpush1.bf16.msra.mxu0 %v1249
      %1697 = vmatprep.subr.bf16.mxu0 0
      %1698 = vmatpush1.bf16.msra.mxu0 %v1248
      %1699 = vmatprep.subr.bf16.mxu0 0
      %1700 = vmatpush2.bf16.msra.mxu0 %v1263
      %1701 = vmatprep.subr.bf16.mxu0 0
      %1702 = vmatpush2.bf16.msra.mxu0 %v1262
      %1703 = vmatprep.subr.bf16.mxu0 0
      %1704 = vmatpush2.bf16.msra.mxu0 %v1261
      %1705 = vmatprep.subr.bf16.mxu0 0
      %1706 = vmatpush2.bf16.msra.mxu0 %v1260
      %1707 = vmatprep.subr.bf16.mxu0 0
      %1708 = vmatpush2.bf16.msra.mxu0 %v1259
      %1709 = vmatprep.subr.bf16.mxu0 0
      %1710 = vmatpush2.bf16.msra.mxu0 %v1258
      %1711 = vmatprep.subr.bf16.mxu0 0
      %1712 = vmatpush2.bf16.msra.mxu0 %v1257
      %1713 = vmatprep.subr.bf16.mxu0 0
      %1714 = vmatpush2.bf16.msra.mxu0 %v1256
      %1715 = vmatprep.mubr.bf16.mxu0 %v526
      %1716 = vmatmul.mubr.bf16.gmra.mxu0 %v525
      %v1717 = vpop.f32.mrf.mxu0
      %v1718 = vadd.f32 %v1678, %v1717
      %v1719 = vpop.f32.mrf.mxu0
      %v1720 = vpop.f32.mrf.mxu0
      %v1721 = vpop.f32.mrf.mxu0
      %1722 = vdwg.mxu0
      %1723 = vmatprep.subr.bf16.mxu0 0
      %1724 = vmatpush1.bf16.msra.mxu0 %v1271
      %1725 = vmatprep.subr.bf16.mxu0 0
      %1726 = vmatpush1.bf16.msra.mxu0 %v1270
      %1727 = vmatprep.subr.bf16.mxu0 0
      %1728 = vmatpush1.bf16.msra.mxu0 %v1269
      %1729 = vmatprep.subr.bf16.mxu0 0
      %1730 = vmatpush1.bf16.msra.mxu0 %v1268
      %1731 = vmatprep.subr.bf16.mxu0 0
      %1732 = vmatpush1.bf16.msra.mxu0 %v1267
      %1733 = vmatprep.subr.bf16.mxu0 0
      %1734 = vmatpush1.bf16.msra.mxu0 %v1266
      %1735 = vmatprep.subr.bf16.mxu0 0
      %1736 = vmatpush1.bf16.msra.mxu0 %v1265
      %1737 = vmatprep.subr.bf16.mxu0 0
      %1738 = vmatpush1.bf16.msra.mxu0 %v1264
      %1739 = vmatprep.subr.bf16.mxu0 0
      %1740 = vmatpush2.bf16.msra.mxu0 %v1279
      %1741 = vmatprep.subr.bf16.mxu0 0
      %1742 = vmatpush2.bf16.msra.mxu0 %v1278
      %1743 = vmatprep.subr.bf16.mxu0 0
      %1744 = vmatpush2.bf16.msra.mxu0 %v1277
      %1745 = vmatprep.subr.bf16.mxu0 0
      %1746 = vmatpush2.bf16.msra.mxu0 %v1276
      %1747 = vmatprep.subr.bf16.mxu0 0
      %1748 = vmatpush2.bf16.msra.mxu0 %v1275
      %1749 = vmatprep.subr.bf16.mxu0 0
      %1750 = vmatpush2.bf16.msra.mxu0 %v1274
      %1751 = vmatprep.subr.bf16.mxu0 0
      %1752 = vmatpush2.bf16.msra.mxu0 %v1273
      %1753 = vmatprep.subr.bf16.mxu0 0
      %1754 = vmatpush2.bf16.msra.mxu0 %v1272
      %1755 = vmatprep.mubr.bf16.mxu0 %v528
      %1756 = vmatmul.mubr.bf16.gmra.mxu0 %v527
      %v1757 = vpop.f32.mrf.mxu0
      %v1758 = vadd.f32 %v1718, %v1757
      %v1759 = vpop.f32.mrf.mxu0
      %v1760 = vpop.f32.mrf.mxu0
      %v1761 = vpop.f32.mrf.mxu0
      %1762 = vdwg.mxu0
      %1763 = vmatprep.subr.bf16.mxu0 0
      %1764 = vmatpush1.bf16.msra.mxu0 %v1287
      %1765 = vmatprep.subr.bf16.mxu0 0
      %1766 = vmatpush1.bf16.msra.mxu0 %v1286
      %1767 = vmatprep.subr.bf16.mxu0 0
      %1768 = vmatpush1.bf16.msra.mxu0 %v1285
      %1769 = vmatprep.subr.bf16.mxu0 0
      %1770 = vmatpush1.bf16.msra.mxu0 %v1284
      %1771 = vmatprep.subr.bf16.mxu0 0
      %1772 = vmatpush1.bf16.msra.mxu0 %v1283
      %1773 = vmatprep.subr.bf16.mxu0 0
      %1774 = vmatpush1.bf16.msra.mxu0 %v1282
      %1775 = vmatprep.subr.bf16.mxu0 0
      %1776 = vmatpush1.bf16.msra.mxu0 %v1281
      %1777 = vmatprep.subr.bf16.mxu0 0
      %1778 = vmatpush1.bf16.msra.mxu0 %v1280
      %1779 = vmatprep.subr.bf16.mxu0 0
      %1780 = vmatpush2.bf16.msra.mxu0 %v1295
      %1781 = vmatprep.subr.bf16.mxu0 0
      %1782 = vmatpush2.bf16.msra.mxu0 %v1294
      %1783 = vmatprep.subr.bf16.mxu0 0
      %1784 = vmatpush2.bf16.msra.mxu0 %v1293
      %1785 = vmatprep.subr.bf16.mxu0 0
      %1786 = vmatpush2.bf16.msra.mxu0 %v1292
      %1787 = vmatprep.subr.bf16.mxu0 0
      %1788 = vmatpush2.bf16.msra.mxu0 %v1291
      %1789 = vmatprep.subr.bf16.mxu0 0
      %1790 = vmatpush2.bf16.msra.mxu0 %v1290
      %1791 = vmatprep.subr.bf16.mxu0 0
      %1792 = vmatpush2.bf16.msra.mxu0 %v1289
      %1793 = vmatprep.subr.bf16.mxu0 0
      %1794 = vmatpush2.bf16.msra.mxu0 %v1288
      %1795 = vmatprep.mubr.bf16.mxu0 %v530
      %1796 = vmatmul.mubr.bf16.gmra.mxu0 %v529
      %v1797 = vpop.f32.mrf.mxu0
      %v1798 = vadd.f32 %v1758, %v1797
      %v1799 = vpop.f32.mrf.mxu0
      %v1800 = vpop.f32.mrf.mxu0
      %v1801 = vpop.f32.mrf.mxu0
      %1802 = vdwg.mxu0
      %1803 = vmatprep.subr.bf16.mxu0 0
      %1804 = vmatpush1.bf16.msra.mxu0 %v1303
      %1805 = vmatprep.subr.bf16.mxu0 0
      %1806 = vmatpush1.bf16.msra.mxu0 %v1302
      %1807 = vmatprep.subr.bf16.mxu0 0
      %1808 = vmatpush1.bf16.msra.mxu0 %v1301
      %1809 = vmatprep.subr.bf16.mxu0 0
      %1810 = vmatpush1.bf16.msra.mxu0 %v1300
      %1811 = vmatprep.subr.bf16.mxu0 0
      %1812 = vmatpush1.bf16.msra.mxu0 %v1299
      %1813 = vmatprep.subr.bf16.mxu0 0
      %1814 = vmatpush1.bf16.msra.mxu0 %v1298
      %1815 = vmatprep.subr.bf16.mxu0 0
      %1816 = vmatpush1.bf16.msra.mxu0 %v1297
      %1817 = vmatprep.subr.bf16.mxu0 0
      %1818 = vmatpush1.bf16.msra.mxu0 %v1296
      %1819 = vmatprep.subr.bf16.mxu0 0
      %1820 = vmatpush2.bf16.msra.mxu0 %v1311
      %1821 = vmatprep.subr.bf16.mxu0 0
      %1822 = vmatpush2.bf16.msra.mxu0 %v1310
      %1823 = vmatprep.subr.bf16.mxu0 0
      %1824 = vmatpush2.bf16.msra.mxu0 %v1309
      %1825 = vmatprep.subr.bf16.mxu0 0
      %1826 = vmatpush2.bf16.msra.mxu0 %v1308
      %1827 = vmatprep.subr.bf16.mxu0 0
      %1828 = vmatpush2.bf16.msra.mxu0 %v1307
      %1829 = vmatprep.subr.bf16.mxu0 0
      %1830 = vmatpush2.bf16.msra.mxu0 %v1306
      %1831 = vmatprep.subr.bf16.mxu0 0
      %1832 = vmatpush2.bf16.msra.mxu0 %v1305
      %1833 = vmatprep.subr.bf16.mxu0 0
      %1834 = vmatpush2.bf16.msra.mxu0 %v1304
      %1835 = vmatprep.mubr.bf16.mxu0 %v532
      %1836 = vmatmul.mubr.bf16.gmra.mxu0 %v531
      %v1837 = vpop.f32.mrf.mxu0
      %v1838 = vadd.f32 %v1798, %v1837
      %v1839 = vpop.f32.mrf.mxu0
      %v1840 = vpop.f32.mrf.mxu0
      %v1841 = vpop.f32.mrf.mxu0
      %1842 = vdwg.mxu0
      %1843 = vmatprep.subr.bf16.mxu0 0
      %1844 = vmatpush1.bf16.msra.mxu0 %v1319
      %1845 = vmatprep.subr.bf16.mxu0 0
      %1846 = vmatpush1.bf16.msra.mxu0 %v1318
      %1847 = vmatprep.subr.bf16.mxu0 0
      %1848 = vmatpush1.bf16.msra.mxu0 %v1317
      %1849 = vmatprep.subr.bf16.mxu0 0
      %1850 = vmatpush1.bf16.msra.mxu0 %v1316
      %1851 = vmatprep.subr.bf16.mxu0 0
      %1852 = vmatpush1.bf16.msra.mxu0 %v1315
      %1853 = vmatprep.subr.bf16.mxu0 0
      %1854 = vmatpush1.bf16.msra.mxu0 %v1314
      %1855 = vmatprep.subr.bf16.mxu0 0
      %1856 = vmatpush1.bf16.msra.mxu0 %v1313
      %1857 = vmatprep.subr.bf16.mxu0 0
      %1858 = vmatpush1.bf16.msra.mxu0 %v1312
      %1859 = vmatprep.subr.bf16.mxu0 0
      %1860 = vmatpush2.bf16.msra.mxu0 0
      %1861 = vmatprep.subr.bf16.mxu0 0
      %1862 = vmatpush2.bf16.msra.mxu0 0
      %1863 = vmatprep.subr.bf16.mxu0 0
      %1864 = vmatpush2.bf16.msra.mxu0 0
      %1865 = vmatprep.subr.bf16.mxu0 0
      %1866 = vmatpush2.bf16.msra.mxu0 0
      %1867 = vmatprep.subr.bf16.mxu0 0
      %1868 = vmatpush2.bf16.msra.mxu0 0
      %1869 = vmatprep.subr.bf16.mxu0 0
      %1870 = vmatpush2.bf16.msra.mxu0 0
      %1871 = vmatprep.subr.bf16.mxu0 0
      %1872 = vmatpush2.bf16.msra.mxu0 %v1481
      %1873 = vmatprep.subr.bf16.mxu0 0
      %1874 = vmatpush2.bf16.msra.mxu0 %v1320
      %1875 = vmatprep.mubr.bf16.mxu0 %v1477
      %1876 = vmatmul.mubr.bf16.gmra.mxu0 %v533
      %v1877 = vpop.f32.mrf.mxu0
      %v1878 = vadd.f32 %v1838, %v1877
      %v1879 = vpop.f32.mrf.mxu0
      %v1880 = vpop.f32.mrf.mxu0
      %v1881 = vpop.f32.mrf.mxu0
      %1882 = vdwg.mxu0
      %p1883 = scmp.eq.s32.totalorder %s15, 0
      // Predicated region
      $region29: #{domain_classifier_forward.2} parent=27 // pred_check
        %p1884 = pneg %p1883
      $region30: #{domain_classifier_forward.2} parent=27 // pred_check_branch
        %1886 = sbr.rel (%p1884) target = $region32
      $region31: #{domain_classifier_forward.2} parent=27 // pred_region
        %1887 = vst [vmem:[%s3] sm:$0x3] 0.0
      $region32: #{domain_classifier_forward.2} parent=27 // pred_fallthru
        _
      %v1888 = vld [vmem:[%s3] sm:$0x1]
      %v1889 = vrot.slane %v1878, 4
      %v1890 = vadd.f32 %v1878, %v1889
      %v1891 = vrot.slane %v1890, 2
      %v1892 = vadd.f32 %v1890, %v1891
      %v1893 = vrot.slane %v1892, 1
      %v1894 = vadd.f32 %v1892, %v1893
      %v1895 = vadd.f32 %v1888, %v1894
      %1896 = vst [vmem:[%s3] sm:$0x1] %v1895
      %v1897 = vld [vmem:[%s3 + $0x1] sm:$0x1]
      %v1898 = vmul.f32 %v1878, %v1878
      %v1899 = vrot.slane %v1898, 4
      %v1900 = vadd.f32 %v1898, %v1899
      %v1901 = vrot.slane %v1900, 2
      %v1902 = vadd.f32 %v1900, %v1901
      %v1903 = vrot.slane %v1902, 1
      %v1904 = vadd.f32 %v1902, %v1903
      %v1905 = vadd.f32 %v1897, %v1904
      %1906 = vst [vmem:[%s3 + $0x1] sm:$0x1] %v1905
      %v1907 = vpack.c.bf16 %v1878, %v1878
      %1908 = vst [vmem:[%s166] sm:$0xf] %v1907
      %p1909 = scmp.lt.s32.totalorder %s15, 1
      %s1910 = scalar_select %p1909, %s15, 1
      %s1911 = smul.addr %s1910, 4
      %s1912 = scalar_lea.vmem %s2, %s1911
      // Predicated region
      $region33: #{domain_classifier_forward.2} parent=27 // pred_check
        %p1913 = pneg %p80
      $region34: #{domain_classifier_forward.2} parent=27 // pred_check_branch
        %1915 = sbr.rel (%p1913) target = $region36
      $region35: #{domain_classifier_forward.2} parent=27 // pred_region
        _
      $region36: #{domain_classifier_forward.2} parent=27 // pred_fallthru
        _
      // Predicated region
      $region37: #{domain_classifier_forward.2} parent=27 // pred_check
        %p1916 = pneg %p101
      $region38: #{domain_classifier_forward.2} parent=27 // pred_check_branch
        %1918 = sbr.rel (%p1916) target = $region40
      $region39: #{domain_classifier_forward.2} parent=27 // pred_region
        _
      $region40: #{domain_classifier_forward.2} parent=27 // pred_fallthru
        _
      // Predicated region
      $region41: #{domain_classifier_forward.2} parent=27 // pred_check
        %p1919 = pneg %p101
      $region42: #{domain_classifier_forward.2} parent=27 // pred_check_branch
        %1921 = sbr.rel (%p1919) target = $region44
      $region43: #{domain_classifier_forward.2} parent=27 // pred_region
        _
      $region44: #{domain_classifier_forward.2} parent=27 // pred_fallthru
        _
    $region28: #{domain_classifier_forward.2} parent=5 // pred_fallthru
      _
    %p1922 = scmp.le.s32.totalorder 2, %s10
    // Predicated region
    $region45: #{domain_classifier_forward.2} parent=5 // pred_check
      %p1923 = pneg %p1922
    $region46: #{domain_classifier_forward.2} parent=5 // pred_check_branch
      %1925 = sbr.rel (%p1923) target = $region48
    $region47: #{domain_classifier_forward.2} parent=5 // pred_region
      %s1926 = ssub.s32 %s10, 2
      // Predicated region
      $region49: #{domain_classifier_forward.2} parent=47 // pred_check
        %p1927 = pneg %p86
      $region50: #{domain_classifier_forward.2} parent=47 // pred_check_branch
        %1929 = sbr.rel (%p1927) target = $region52
      $region51: #{domain_classifier_forward.2} parent=47 // pred_region
        %p1930 = scmp.lt.s32.totalorder %s16, 1
        %s1931 = scalar_select %p1930, %s16, 1
        %s1932 = smul.addr %s1931, 4
        %s1933 = scalar_lea.vmem %s2, %s1932
      $region52: #{domain_classifier_forward.2} parent=47 // pred_fallthru
        _
    $region48: #{domain_classifier_forward.2} parent=5 // pred_fallthru
      _
  $region6: #{domain_classifier_forward.2} parent=0 // loop_footer
    %s14 = sadd.s32 1, %s10
  $region7: #{domain_classifier_forward.2} parent=0 // loop_footer_branch
    %9 = sbr.rel target = $region3
  $region8: #{domain_classifier_forward.2} parent=0 // loop_exit
    _

</llo_original>
